<compile_context>
chip_gen: v6e
topology: v6e:2x2x1
jax: 0.10.0
libtpu: 0.0.40
codegen_flags: <defaults>
</compile_context>

<pallas_src>
from functools import partial

import jax
import jax.numpy as jnp
from jax.experimental import pallas as pl
from jax.experimental.pallas import tpu as pltpu

LANE = 128


# ---------------------------------------------------------------------------
# Encoder kernel (single launch): encoder_q + encoder_k + l_pos
# ---------------------------------------------------------------------------

def _encoder_kernel(xq_ref, xk_ref, wq_ref, bq_ref, wk_ref, bk_ref,
                    q_ref, k_ref, lpos_ref):
    """All operands are full-array VMEM blocks (no grid); runs exactly once."""

    def encode(x_ref, w_ref, b_ref):
        # GAP is folded into w (w_eff = tile(w)/HW), so pooling + projection is one MXU
        # matmul with a >=128-deep contraction (no XLU cross-lane reduce over HW).
        proj = jnp.dot(x_ref[...].astype(jnp.bfloat16), w_ref[...],
                       preferred_element_type=jnp.float32)
        proj = proj + b_ref[...]
        # L2-normalize in f32; rsqrt uses the otherwise-idle EUP slot.
        inv_norm = jax.lax.rsqrt(
            jnp.maximum(jnp.sum(proj * proj, axis=-1, keepdims=True), 1e-24))
        return proj * inv_norm                                  # (N, D) f32

    q = encode(xq_ref, wq_ref, bq_ref)
    k = encode(xk_ref, wk_ref, bk_ref)

    # l_pos = einsum('nc,nc->n')[:, None]; broadcast to a full 128-lane block so the
    # store is an unmasked full-width vst.  The wrapper slices [:, :1].
    l_pos = jnp.sum(q * k, axis=-1, keepdims=True)
    lpos_ref[...] = jnp.broadcast_to(l_pos, lpos_ref.shape)

    # bf16 features: q feeds the bf16 MXU l_neg kernel, k is enqueued into the bf16 queue.
    q_ref[...] = q.astype(jnp.bfloat16)
    k_ref[...] = k.astype(jnp.bfloat16)


def moco_encode(im_q, im_k, wq, bq, wk, bk):
    N, C, H, W = im_q.shape
    D = wq.shape[1]
    HW = H * W

    xq = im_q.reshape(N, C * HW)
    xk = im_k.reshape(N, C * HW)

    # Fold the global average pool into the projection weights: w_eff[c*HW + s, d] =
    # w[c, d] / HW, cast once to bf16 outside the kernel.
    def fold(w):
        w_eff = jnp.broadcast_to((w * (1.0 / HW))[:, None, :], (C, HW, D))
        return w_eff.reshape(C * HW, D).astype(jnp.bfloat16)

    weq, wek = fold(wq), fold(wk)
    bq2 = bq.reshape(1, D).astype(jnp.float32)
    bk2 = bk.reshape(1, D).astype(jnp.float32)

    q_bf, k_bf, lpos_pad = pl.pallas_call(
        _encoder_kernel,
        out_shape=(
            jax.ShapeDtypeStruct((N, D), jnp.bfloat16),     # q features (bf16)
            jax.ShapeDtypeStruct((N, D), jnp.bfloat16),     # k features (bf16)
            jax.ShapeDtypeStruct((N, LANE), jnp.float32),   # l_pos, lane-padded
        ),
    )(xq, xk, weq, bq2, wek, bk2)
    return q_bf, k_bf, lpos_pad


# ---------------------------------------------------------------------------
# l_neg kernel: q @ queue^T, tiled over the (bf16) queue rows
# ---------------------------------------------------------------------------

def _lneg_kernel(q_ref, queue_ref, out_ref):
    # Pure bf16 MXU matmul with f32 accumulation; the kernel is HBM-bound on the bf16
    # queue stream, everything else stays resident in VMEM across the (parallel) grid.
    out_ref[...] = jax.lax.dot_general(
        q_ref[...], queue_ref[...],
        dimension_numbers=(((1,), (1,)), ((), ())),
        preferred_element_type=jnp.float32)


def moco_lneg(q_bf, queue_kd, *, tk=None):
    N, D = q_bf.shape
    K = queue_kd.shape[0]
    if tk is None:
        # bf16 queue tile = tk*D*2 bytes; 4096 -> 1 MiB per buffer, comfortably inside
        # every generation's scoped VMEM with double buffering.  Raise vmem_limit_bytes
        # via pltpu.CompilerParams if you push tk >= 16K on v7x (64 MiB physical VMEM).
        tk = min(K, 4096)
    assert K % tk == 0, (K, tk)

    return pl.pallas_call(
        _lneg_kernel,
        out_shape=jax.ShapeDtypeStruct((N, K), jnp.float32),
        grid=(K // tk,),
        in_specs=[
            pl.BlockSpec((N, D), lambda j: (0, 0)),          # q (grid-invariant read)
            pl.BlockSpec((tk, D), lambda j: (j, 0)),         # queue row-tile (bf16)
        ],
        out_specs=pl.BlockSpec((N, tk), lambda j: (0, j)),
        compiler_params=pltpu.CompilerParams(
            dimension_semantics=("parallel",),               # K tiles across both v7x TCs
        ),
    )(q_bf, queue_kd)


# ---------------------------------------------------------------------------
# Momentum update: every parameter leaf in one launch, no packing, aliased in place
# ---------------------------------------------------------------------------

def _momentum_kernel(*refs, m, n):
    # refs = (q_0..q_{n-1}, k_0..k_{n-1}, out_0..out_{n-1}); elementwise VPU.
    q_refs, k_refs, out_refs = refs[:n], refs[n:2 * n], refs[2 * n:]
    for q_ref, k_ref, out_ref in zip(q_refs, k_refs, out_refs):
        out_ref[...] = k_ref[...] * m + q_ref[...] * (1.0 - m)


def momentum_update_params(params_q, params_k, m):
    """param_k <- m * param_k + (1 - m) * param_q for ALL (float) leaves in ONE launch.

    Each leaf is its own full-array VMEM block (no concat/pad/reshape passes), computed
    in its native dtype, and the key-encoder leaves are aliased onto the outputs so the
    update is in place when params_k is donated at the jit boundary.
    """
    leaves_q, treedef = jax.tree_util.tree_flatten(params_q)
    leaves_k, treedef_k = jax.tree_util.tree_flatten(params_k)
    assert treedef == treedef_k
    n = len(leaves_k)
    shapes = [l.shape for l in leaves_k]

    def to2d(x):
        if x.ndim == 0:
            return x.reshape(1, 1)
        if x.ndim == 1:
            return x.reshape(1, x.shape[0])
        return x.reshape(-1, x.shape[-1])

    q2 = [to2d(l) for l in leaves_q]
    k2 = [to2d(l) for l in leaves_k]

    outs = pl.pallas_call(
        partial(_momentum_kernel, m=float(m), n=n),
        out_shape=tuple(jax.ShapeDtypeStruct(x.shape, x.dtype) for x in k2),
        # Inputs are (q leaves..., k leaves...); alias each k leaf onto its output.
        input_output_aliases={n + i: i for i in range(n)},
    )(*q2, *k2)
    if not isinstance(outs, (list, tuple)):
        outs = (outs,)

    new_leaves = [o.reshape(s) for o, s in zip(outs, shapes)]
    return jax.tree_util.tree_unflatten(treedef, new_leaves)


# ---------------------------------------------------------------------------
# Dequeue-and-enqueue: in-place aliased write of only the N new key rows
# ---------------------------------------------------------------------------

def _enqueue_kernel(ptr_ref, k_ref, queue_hbm_ref, out_ref):
    # queue_hbm_ref is the raw (aliased) HBM queue; it is never DMA'd — only the (N, D)
    # output block at the queue pointer is written, the rest of the buffer is untouched.
    del ptr_ref, queue_hbm_ref
    out_ref[...] = k_ref[...].astype(out_ref.dtype)


def dequeue_and_enqueue(queue_kd, keys, ptr):
    K, D = queue_kd.shape
    N = keys.shape[0]
    assert K % N == 0  # same contract as the PyTorch module
    ptr_block = (jnp.asarray(ptr, jnp.int32) // N).reshape(1)   # row-block index

    new_queue = pl.pallas_call(
        _enqueue_kernel,
        out_shape=jax.ShapeDtypeStruct((K, D), queue_kd.dtype),
        grid_spec=pltpu.PrefetchScalarGridSpec(
            num_scalar_prefetch=1,
            grid=(1,),
            in_specs=[
                pl.BlockSpec((N, D), lambda i, p: (0, 0)),      # new keys (bf16)
                pl.BlockSpec(memory_space=pl.ANY),              # aliased queue (no DMA)
            ],
            out_specs=pl.BlockSpec((N, D), lambda i, p: (p[0], 0)),
        ),
        # Flattened call inputs are (ptr_block, keys, queue_kd) -> alias queue to out 0.
        # The queue is donated at the jit boundary so this is a true in-place update.
        input_output_aliases={2: 0},
    )(ptr_block, keys, queue_kd)

    new_ptr = (jnp.asarray(ptr, jnp.int32) + N) % K
    return new_queue, new_ptr


# ---------------------------------------------------------------------------
# MoCo forward (functional state: params_k, queue, queue_ptr returned updated)
# ---------------------------------------------------------------------------

def moco_forward(params_q, params_k, queue_kd, queue_ptr, im_q, im_k,
                 *, m=0.999, tk=None):
    """Returns (logits, new_params_k, new_queue, new_ptr).  Logits are NOT divided by T,
    matching the reference module's forward."""
    # Momentum update of the key encoder (no grad), single fused launch, in place.
    new_pk = momentum_update_params(params_q, params_k, m)

    # Batch shuffle / unshuffle for BN is an identity at world_size == 1 and is skipped
    # entirely (no HBM gathers).  TODO(synk): multi-device DDP shuffle / all_gather of
    # keys before enqueue would use pltpu.make_async_remote_copy; not emulated.

    # encoder_q(im_q), encoder_k(im_k) and l_pos in ONE tiny launch (outside the K grid).
    q_bf, k_bf, lpos_pad = moco_encode(
        im_q, im_k, params_q["w"], params_q["b"], new_pk["w"], new_pk["b"])
    k_bf = jax.lax.stop_gradient(k_bf)

    # l_neg = q @ queue^T, tiled over the bf16 queue rows.
    l_neg = moco_lneg(q_bf, queue_kd, tk=tk)

    logits = jnp.concatenate([lpos_pad[:, :1], l_neg], axis=1)   # (N, 1 + K)

    # In-place (aliased + donated) enqueue of the new bf16 keys at the queue pointer.
    new_queue, new_ptr = dequeue_and_enqueue(queue_kd, k_bf, queue_ptr)

    return logits, new_pk, new_queue, new_ptr


# ---------------------------------------------------------------------------
# Main
# ---------------------------------------------------------------------------

if __name__ == "__main__":
    # Small shapes consistent with MoCo: batch=16 (keeps the bf16 enqueue block
    # tile-aligned), C=4, H=W=16, feature dim=128 (the real MoCo dim, lane-aligned),
    # queue K=512 with K-tile 256 -> l_neg grid of 2 steps.
    N, C, H, W = 16, 4, 16, 16
    DIM, K, M, TK = 128, 512, 0.999, 256
    assert K % N == 0

    root = jax.random.PRNGKey(0)
    k_imq, k_imk, k_w, k_queue = jax.random.split(root, 4)

    im_q = jax.random.normal(k_imq, (N, C, H, W), dtype=jnp.float32)
    im_k = jax.random.normal(k_imk, (N, C, H, W), dtype=jnp.float32)

    # Deterministic "encoder" parameters (GAP -> linear -> L2 norm); encoder_k starts
    # as a copy of encoder_q, as in the reference.
    params_q = {
        "w": 0.02 * jax.random.normal(k_w, (C, DIM), dtype=jnp.float32),
        "b": jnp.zeros((DIM,), dtype=jnp.float32),
    }
    params_k = jax.tree_util.tree_map(jnp.array, params_q)

    # Queue of negatives, stored (K, dim) (transposed vs. the PyTorch (dim, K) buffer),
    # each key L2-normalized, kept bf16 end-to-end in HBM.
    queue = jax.random.normal(k_queue, (K, DIM), dtype=jnp.float32)
    queue = queue * jax.lax.rsqrt(
        jnp.maximum(jnp.sum(queue * queue, axis=1, keepdims=True), 1e-24))
    queue = queue.astype(jnp.bfloat16)
    queue_ptr = jnp.zeros((), jnp.int32)

    # Donate params_k and the queue so the aliased Pallas updates are truly in place.
    moco_step = jax.jit(moco_forward, static_argnames=("m", "tk"),
                        donate_argnums=(1, 2))
    logits, new_pk, queue_new, ptr_new = moco_step(
        params_q, params_k, queue, queue_ptr, im_q, im_k, m=M, tk=TK)

    jax.block_until_ready((logits, new_pk, queue_new, ptr_new))

    assert logits.shape == (N, 1 + K), logits.shape
    assert logits.dtype == jnp.float32
    assert bool(jnp.all(jnp.isfinite(logits)))
    assert queue_new.shape == (K, DIM) and queue_new.dtype == jnp.bfloat16
    assert int(ptr_new) == N % K
    assert new_pk["w"].shape == params_q["w"].shape
    assert new_pk["w"].dtype == params_q["w"].dtype
    print("KERNEL_OK")
</pallas_src>

<mosaic_0001>
module attributes {stable_mosaic.version = 11 : i64} {
  func.func @_encoder_kernel(%arg0: memref<16x1024xf32, #tpu.memory_space<vmem>>, %arg1: memref<16x1024xf32, #tpu.memory_space<vmem>>, %arg2: memref<1024x128xbf16, #tpu.memory_space<vmem>>, %arg3: memref<1x128xf32, #tpu.memory_space<vmem>>, %arg4: memref<1024x128xbf16, #tpu.memory_space<vmem>>, %arg5: memref<1x128xf32, #tpu.memory_space<vmem>>, %arg6: memref<16x128xbf16, #tpu.memory_space<vmem>>, %arg7: memref<16x128xbf16, #tpu.memory_space<vmem>>, %arg8: memref<16x128xf32, #tpu.memory_space<vmem>>) attributes {dimension_semantics = [], scalar_prefetch = 0 : i64, scratch_operands = 0 : i64, tpu.core_type = #tpu.core_type<tc>} {
    %c0 = arith.constant 0 : index
    %c0_0 = arith.constant 0 : index
    %0 = vector.load %arg0[%c0, %c0_0] : memref<16x1024xf32, #tpu.memory_space<vmem>>, vector<16x1024xf32>
    %1 = arith.truncf %0 : vector<16x1024xf32> to vector<16x1024xbf16>
    %c0_1 = arith.constant 0 : index
    %c0_2 = arith.constant 0 : index
    %2 = vector.load %arg2[%c0_1, %c0_2] : memref<1024x128xbf16, #tpu.memory_space<vmem>>, vector<1024x128xbf16>
    %cst = arith.constant dense<0.000000e+00> : vector<16x128xf32>
    %3 = tpu.matmul %1, %2, %cst {dimension_numbers = #tpu.dot_dimension_numbers<[1], [0], [0], [1], [0, 0, 1, 1], [], []>} : vector<16x1024xbf16>, vector<1024x128xbf16>, vector<16x128xf32> -> vector<16x128xf32>
    %c0_3 = arith.constant 0 : index
    %c0_4 = arith.constant 0 : index
    %4 = vector.load %arg3[%c0_3, %c0_4] : memref<1x128xf32, #tpu.memory_space<vmem>>, vector<1x128xf32>
    %5 = vector.broadcast %4 : vector<1x128xf32> to vector<16x128xf32>
    %6 = arith.addf %3, %5 : vector<16x128xf32>
    %7 = arith.mulf %6, %6 : vector<16x128xf32>
    %cst_5 = arith.constant dense<0.000000e+00> : vector<16xf32>
    %8 = vector.multi_reduction <add>, %7, %cst_5 [1] : vector<16x128xf32> to vector<16xf32>
    %9 = vector.shape_cast %8 : vector<16xf32> to vector<16x1xf32>
    %cst_6 = arith.constant 1.000000e-24 : f32
    %10 = vector.broadcast %cst_6 : f32 to vector<16x1xf32>
    %11 = arith.maximumf %9, %10 : vector<16x1xf32>
    %12 = math.rsqrt %11 : vector<16x1xf32>
    %13 = vector.broadcast %12 : vector<16x1xf32> to vector<16x128xf32>
    %14 = arith.mulf %6, %13 : vector<16x128xf32>
    %c0_7 = arith.constant 0 : index
    %c0_8 = arith.constant 0 : index
    %15 = vector.load %arg1[%c0_7, %c0_8] : memref<16x1024xf32, #tpu.memory_space<vmem>>, vector<16x1024xf32>
    %16 = arith.truncf %15 : vector<16x1024xf32> to vector<16x1024xbf16>
    %c0_9 = arith.constant 0 : index
    %c0_10 = arith.constant 0 : index
    %17 = vector.load %arg4[%c0_9, %c0_10] : memref<1024x128xbf16, #tpu.memory_space<vmem>>, vector<1024x128xbf16>
    %cst_11 = arith.constant dense<0.000000e+00> : vector<16x128xf32>
    %18 = tpu.matmul %16, %17, %cst_11 {dimension_numbers = #tpu.dot_dimension_numbers<[1], [0], [0], [1], [0, 0, 1, 1], [], []>} : vector<16x1024xbf16>, vector<1024x128xbf16>, vector<16x128xf32> -> vector<16x128xf32>
    %c0_12 = arith.constant 0 : index
    %c0_13 = arith.constant 0 : index
    %19 = vector.load %arg5[%c0_12, %c0_13] : memref<1x128xf32, #tpu.memory_space<vmem>>, vector<1x128xf32>
    %20 = vector.broadcast %19 : vector<1x128xf32> to vector<16x128xf32>
    %21 = arith.addf %18, %20 : vector<16x128xf32>
    %22 = arith.mulf %21, %21 : vector<16x128xf32>
    %cst_14 = arith.constant dense<0.000000e+00> : vector<16xf32>
    %23 = vector.multi_reduction <add>, %22, %cst_14 [1] : vector<16x128xf32> to vector<16xf32>
    %24 = vector.shape_cast %23 : vector<16xf32> to vector<16x1xf32>
    %cst_15 = arith.constant 1.000000e-24 : f32
    %25 = vector.broadcast %cst_15 : f32 to vector<16x1xf32>
    %26 = arith.maximumf %24, %25 : vector<16x1xf32>
    %27 = math.rsqrt %26 : vector<16x1xf32>
    %28 = vector.broadcast %27 : vector<16x1xf32> to vector<16x128xf32>
    %29 = arith.mulf %21, %28 : vector<16x128xf32>
    %30 = arith.mulf %14, %29 : vector<16x128xf32>
    %cst_16 = arith.constant dense<0.000000e+00> : vector<16xf32>
    %31 = vector.multi_reduction <add>, %30, %cst_16 [1] : vector<16x128xf32> to vector<16xf32>
    %32 = vector.shape_cast %31 : vector<16xf32> to vector<16x1xf32>
    %33 = vector.shape_cast %32 : vector<16x1xf32> to vector<16x1xf32>
    %34 = vector.broadcast %33 : vector<16x1xf32> to vector<16x128xf32>
    %c0_17 = arith.constant 0 : index
    %c0_18 = arith.constant 0 : index
    %35 = vector.load %arg8[%c0_17, %c0_18] : memref<16x128xf32, #tpu.memory_space<vmem>>, vector<16x128xf32>
    tpu.vector_store %arg8[%c0_17, %c0_18], %34 {strides = array<i32>} : memref<16x128xf32, #tpu.memory_space<vmem>>, vector<16x128xf32>,
    %36 = arith.truncf %14 : vector<16x128xf32> to vector<16x128xbf16>
    %c0_19 = arith.constant 0 : index
    %c0_20 = arith.constant 0 : index
    %37 = vector.load %arg6[%c0_19, %c0_20] : memref<16x128xbf16, #tpu.memory_space<vmem>>, vector<16x128xbf16>
    tpu.vector_store %arg6[%c0_19, %c0_20], %36 {strides = array<i32>} : memref<16x128xbf16, #tpu.memory_space<vmem>>, vector<16x128xbf16>,
    %38 = arith.truncf %29 : vector<16x128xf32> to vector<16x128xbf16>
    %c0_21 = arith.constant 0 : index
    %c0_22 = arith.constant 0 : index
    %39 = vector.load %arg7[%c0_21, %c0_22] : memref<16x128xbf16, #tpu.memory_space<vmem>>, vector<16x128xbf16>
    tpu.vector_store %arg7[%c0_21, %c0_22], %38 {strides = array<i32>} : memref<16x128xbf16, #tpu.memory_space<vmem>>, vector<16x128xbf16>,
    return
  }
}

module attributes {stable_mosaic.version = 11 : i64} {
  func.func @_momentum_kernel(%arg0: memref<1x128xf32, #tpu.memory_space<vmem>>, %arg1: memref<4x128xf32, #tpu.memory_space<vmem>>, %arg2: memref<1x128xf32, #tpu.memory_space<vmem>>, %arg3: memref<4x128xf32, #tpu.memory_space<vmem>>, %arg4: memref<1x128xf32, #tpu.memory_space<vmem>>, %arg5: memref<4x128xf32, #tpu.memory_space<vmem>>) attributes {dimension_semantics = [], scalar_prefetch = 0 : i64, scratch_operands = 0 : i64, tpu.core_type = #tpu.core_type<tc>} {
    %c0 = arith.constant 0 : index
    %c0_0 = arith.constant 0 : index
    %0 = vector.load %arg2[%c0, %c0_0] : memref<1x128xf32, #tpu.memory_space<vmem>>, vector<1x128xf32>
    %cst = arith.constant 9.990000e-01 : f32
    %1 = vector.broadcast %cst : f32 to vector<1x128xf32>
    %2 = arith.mulf %0, %1 : vector<1x128xf32>
    %c0_1 = arith.constant 0 : index
    %c0_2 = arith.constant 0 : index
    %3 = vector.load %arg0[%c0_1, %c0_2] : memref<1x128xf32, #tpu.memory_space<vmem>>, vector<1x128xf32>
    %cst_3 = arith.constant 1.000000e-03 : f32
    %4 = vector.broadcast %cst_3 : f32 to vector<1x128xf32>
    %5 = arith.mulf %3, %4 : vector<1x128xf32>
    %6 = arith.addf %2, %5 : vector<1x128xf32>
    %c0_4 = arith.constant 0 : index
    %c0_5 = arith.constant 0 : index
    %7 = vector.load %arg4[%c0_4, %c0_5] : memref<1x128xf32, #tpu.memory_space<vmem>>, vector<1x128xf32>
    tpu.vector_store %arg4[%c0_4, %c0_5], %6 {strides = array<i32>} : memref<1x128xf32, #tpu.memory_space<vmem>>, vector<1x128xf32>,
    %c0_6 = arith.constant 0 : index
    %c0_7 = arith.constant 0 : index
    %8 = vector.load %arg3[%c0_6, %c0_7] : memref<4x128xf32, #tpu.memory_space<vmem>>, vector<4x128xf32>
    %cst_8 = arith.constant 9.990000e-01 : f32
    %9 = vector.broadcast %cst_8 : f32 to vector<4x128xf32>
    %10 = arith.mulf %8, %9 : vector<4x128xf32>
    %c0_9 = arith.constant 0 : index
    %c0_10 = arith.constant 0 : index
    %11 = vector.load %arg1[%c0_9, %c0_10] : memref<4x128xf32, #tpu.memory_space<vmem>>, vector<4x128xf32>
    %cst_11 = arith.constant 1.000000e-03 : f32
    %12 = vector.broadcast %cst_11 : f32 to vector<4x128xf32>
    %13 = arith.mulf %11, %12 : vector<4x128xf32>
    %14 = arith.addf %10, %13 : vector<4x128xf32>
    %c0_12 = arith.constant 0 : index
    %c0_13 = arith.constant 0 : index
    %15 = vector.load %arg5[%c0_12, %c0_13] : memref<4x128xf32, #tpu.memory_space<vmem>>, vector<4x128xf32>
    tpu.vector_store %arg5[%c0_12, %c0_13], %14 {strides = array<i32>} : memref<4x128xf32, #tpu.memory_space<vmem>>, vector<4x128xf32>,
    return
  }
}

module attributes {stable_mosaic.version = 11 : i64} {
  func.func @_lneg_kernel(%arg0: i32, %arg1: memref<16x128xbf16, #tpu.memory_space<vmem>>, %arg2: memref<256x128xbf16, #tpu.memory_space<vmem>>, %arg3: memref<16x256xf32, #tpu.memory_space<vmem>>) attributes {dimension_semantics = [#tpu.dimension_semantics<parallel>], iteration_bounds = array<i64: 2>, scalar_prefetch = 0 : i64, scratch_operands = 0 : i64, tpu.core_type = #tpu.core_type<tc>, window_params = [{pipeline_mode = #tpu.pipeline_mode<synchronous>, transform_indices = @transform_0, window_bounds = array<i64: 16, 128>}, {transform_indices = @transform_1, window_bounds = array<i64: 256, 128>}, {transform_indices = @transform_2, window_bounds = array<i64: 16, 256>}]} {
    %c0 = arith.constant 0 : index
    %c0_0 = arith.constant 0 : index
    %0 = vector.load %arg1[%c0, %c0_0] : memref<16x128xbf16, #tpu.memory_space<vmem>>, vector<16x128xbf16>
    %c0_1 = arith.constant 0 : index
    %c0_2 = arith.constant 0 : index
    %1 = vector.load %arg2[%c0_1, %c0_2] : memref<256x128xbf16, #tpu.memory_space<vmem>>, vector<256x128xbf16>
    %cst = arith.constant dense<0.000000e+00> : vector<16x256xf32>
    %2 = tpu.matmul %0, %1, %cst {dimension_numbers = #tpu.dot_dimension_numbers<[1], [1], [0], [0], [0, 0, 1, 0], [], []>} : vector<16x128xbf16>, vector<256x128xbf16>, vector<16x256xf32> -> vector<16x256xf32>
    %c0_3 = arith.constant 0 : index
    %c0_4 = arith.constant 0 : index
    %3 = vector.load %arg3[%c0_3, %c0_4] : memref<16x256xf32, #tpu.memory_space<vmem>>, vector<16x256xf32>
    tpu.vector_store %arg3[%c0_3, %c0_4], %2 {strides = array<i32>} : memref<16x256xf32, #tpu.memory_space<vmem>>, vector<16x256xf32>,
    return
  }
  func.func @transform_0(%arg0: i32) -> (i32, i32) {
    %c0_i32 = arith.constant 0 : i32
    %c0_i32_0 = arith.constant 0 : i32
    %c0_i32_1 = arith.constant 0 : i32
    return %c0_i32, %c0_i32_0 : i32, i32
  }
  func.func @transform_1(%arg0: i32) -> (i32, i32) {
    %c0_i32 = arith.constant 0 : i32
    %c0_i32_0 = arith.constant 0 : i32
    return %arg0, %c0_i32 : i32, i32
  }
  func.func @transform_2(%arg0: i32) -> (i32, i32) {
    %c0_i32 = arith.constant 0 : i32
    %c0_i32_0 = arith.constant 0 : i32
    return %c0_i32, %arg0 : i32, i32
  }
}

module attributes {stable_mosaic.version = 11 : i64} {
  func.func @_enqueue_kernel(%arg0: i32, %arg1: memref<1xi32, #tpu.memory_space<smem>>, %arg2: memref<16x128xbf16, #tpu.memory_space<vmem>>, %arg3: memref<512x128xbf16, #tpu.memory_space<any>>, %arg4: memref<16x128xbf16, #tpu.memory_space<vmem>>) attributes {dimension_semantics = [#tpu.dimension_semantics<arbitrary>], iteration_bounds = array<i64: 1>, scalar_prefetch = 1 : i64, scratch_operands = 0 : i64, tpu.core_type = #tpu.core_type<tc>, window_params = [{pipeline_mode = #tpu.pipeline_mode<synchronous>, transform_indices = @transform_0, window_bounds = array<i64: 16, 128>}, {}, {transform_indices = @transform_2, window_bounds = array<i64: 16, 128>}]} {
    %c0 = arith.constant 0 : index
    %c0_0 = arith.constant 0 : index
    %0 = vector.load %arg2[%c0, %c0_0] : memref<16x128xbf16, #tpu.memory_space<vmem>>, vector<16x128xbf16>
    %c0_1 = arith.constant 0 : index
    %c0_2 = arith.constant 0 : index
    %1 = vector.load %arg4[%c0_1, %c0_2] : memref<16x128xbf16, #tpu.memory_space<vmem>>, vector<16x128xbf16>
    tpu.vector_store %arg4[%c0_1, %c0_2], %0 {strides = array<i32>} : memref<16x128xbf16, #tpu.memory_space<vmem>>, vector<16x128xbf16>,
    return
  }
  func.func @transform_0(%arg0: i32, %arg1: memref<1xi32, #tpu.memory_space<smem>>) -> (i32, i32) {
    %c0_i32 = arith.constant 0 : i32
    %c0_i32_0 = arith.constant 0 : i32
    %c0_i32_1 = arith.constant 0 : i32
    return %c0_i32, %c0_i32_0 : i32, i32
  }
  func.func @transform_2(%arg0: i32, %arg1: memref<1xi32, #tpu.memory_space<smem>>) -> (i32, i32) {
    %c0 = arith.constant 0 : index
    %0 = memref.load %arg1[%c0] : memref<1xi32, #tpu.memory_space<smem>>
    %c0_i32 = arith.constant 0 : i32
    %c0_i32_0 = arith.constant 0 : i32
    return %0, %c0_i32 : i32, i32
  }
}

</mosaic_0001>

<llo_original>
// kernel: moco_forward.4
$region0: #{moco_forward.4}
  #allocation0 [shape = 'u32[]', space=smem, size = 0x4, offset = 0x4, fixed_abs, tag = 'smem constant byte address 0x4 - core index']
  #allocation1 [shape = 'u32[144,128]{1,0:T(1,128)}', space=vmem, size = 0x12000, scoped, tag = 'internal scratch']
  %s0 = inlined_call_operand.vmem [shape: f32[1,128], index: 0, kind: input, shape index: {}]
  %s1 = inlined_call_operand.vmem [shape: f32[4,128], index: 1, kind: input, shape index: {}]
  %s2 = inlined_call_operand.vmem [shape: f32[1,128], index: 2, kind: input, shape index: {}, may-alias: {2,4}]
  %s3 = inlined_call_operand.vmem [shape: f32[4,128], index: 3, kind: input, shape index: {}, may-alias: {3,5}]
  %s4 = inlined_call_operand.vmem [shape: f32[1,128], index: 4, kind: output, shape index: {0}, may-alias: {2,4}]
  %s5 = inlined_call_operand.vmem [shape: f32[4,128], index: 5, kind: output, shape index: {1}, may-alias: {3,5}]
  %6 = xla_tuple %s4, %s5
  %s7 = sld [smem:[#allocation0]]
  $region34: #{moco_forward.4} parent=0
    _
  %s9 = ssub.s32 1, %s7
  %s10 = scalar_select 0, %s9, %s7
  // Predicated region
  $region2: #{moco_forward.4} parent=0 // pred_check
    _
  $region3: #{moco_forward.4} parent=0 // pred_check_branch
    %12 = sbr.rel (0) target = $region5
  $region4: #{moco_forward.4} parent=0 // pred_region
    _
  $region5: #{moco_forward.4} parent=0 // pred_fallthru
    _
  // Predicated region
  $region6: #{moco_forward.4} parent=0 // pred_check
    _
  $region7: #{moco_forward.4} parent=0 // pred_check_branch
    %14 = sbr.rel (0) target = $region9
  $region8: #{moco_forward.4} parent=0 // pred_region
    _
  $region9: #{moco_forward.4} parent=0 // pred_fallthru
    _
  // Predicated region
  $region10: #{moco_forward.4} parent=0 // pred_check
    _
  $region11: #{moco_forward.4} parent=0 // pred_check_branch
    %16 = sbr.rel (0) target = $region13
  $region12: #{moco_forward.4} parent=0 // pred_region
    _
  $region13: #{moco_forward.4} parent=0 // pred_fallthru
    _
  // Predicated region
  $region14: #{moco_forward.4} parent=0 // pred_check
    _
  $region15: #{moco_forward.4} parent=0 // pred_check_branch
    %18 = sbr.rel (0) target = $region17
  $region16: #{moco_forward.4} parent=0 // pred_region
    _
  $region17: #{moco_forward.4} parent=0 // pred_fallthru
    _
  %v19 = vld [vmem:[%s2] sm:$0x1]
  %v20 = vmul.f32 %v19, 0.999
  %v21 = vld [vmem:[%s0] sm:$0x1]
  %v22 = vmul.f32 %v21, 0.001
  %v23 = vadd.f32 %v20, %v22
  %24 = vst [vmem:[%s4] sm:$0x1] %v23
  %v25 = vld [vmem:[%s3] sm:$0xf]
  %v26 = vmul.f32 %v25, 0.999
  %v27 = vld [vmem:[%s1] sm:$0xf]
  %v28 = vmul.f32 %v27, 0.001
  %v29 = vadd.f32 %v26, %v28
  %30 = vst [vmem:[%s5] sm:$0xf] %v29
  // Predicated region
  $region18: #{moco_forward.4} parent=0 // pred_check
    _
  $region19: #{moco_forward.4} parent=0 // pred_check_branch
    %32 = sbr.rel (0) target = $region21
  $region20: #{moco_forward.4} parent=0 // pred_region
    _
  $region21: #{moco_forward.4} parent=0 // pred_fallthru
    _
  // Predicated region
  $region22: #{moco_forward.4} parent=0 // pred_check
    _
  $region23: #{moco_forward.4} parent=0 // pred_check_branch
    %34 = sbr.rel (0) target = $region25
  $region24: #{moco_forward.4} parent=0 // pred_region
    _
  $region25: #{moco_forward.4} parent=0 // pred_fallthru
    _
  // Predicated region
  $region26: #{moco_forward.4} parent=0 // pred_check
    _
  $region27: #{moco_forward.4} parent=0 // pred_check_branch
    %36 = sbr.rel (0) target = $region29
  $region28: #{moco_forward.4} parent=0 // pred_region
    _
  $region29: #{moco_forward.4} parent=0 // pred_fallthru
    _
  // Predicated region
  $region30: #{moco_forward.4} parent=0 // pred_check
    _
  $region31: #{moco_forward.4} parent=0 // pred_check_branch
    %38 = sbr.rel (0) target = $region33
  $region32: #{moco_forward.4} parent=0 // pred_region
    _
  $region33: #{moco_forward.4} parent=0 // pred_fallthru
    _

// kernel: moco_forward.5
$region0: #{moco_forward.5}
  #allocation0 [shape = 'u32[]', space=smem, size = 0x4, offset = 0x4, fixed_abs, tag = 'smem constant byte address 0x4 - core index']
  #allocation1 [shape = 'u32[144,128]{1,0:T(1,128)}', space=vmem, size = 0x12000, scoped, tag = 'internal scratch']
  %s0 = inlined_call_operand.vmem [shape: f32[16,1024], index: 0, kind: input, shape index: {}]
  %s1 = inlined_call_operand.vmem [shape: f32[16,1024], index: 1, kind: input, shape index: {}]
  %s2 = inlined_call_operand.vmem [shape: bf16[1024,128], index: 2, kind: input, shape index: {}]
  %s3 = inlined_call_operand.vmem [shape: f32[1,128], index: 3, kind: input, shape index: {}]
  %s4 = inlined_call_operand.vmem [shape: bf16[1024,128], index: 4, kind: input, shape index: {}]
  %s5 = inlined_call_operand.vmem [shape: f32[1,128], index: 5, kind: input, shape index: {}]
  %s6 = inlined_call_operand.vmem [shape: bf16[16,128], index: 6, kind: output, shape index: {0}]
  %s7 = inlined_call_operand.vmem [shape: bf16[16,128], index: 7, kind: output, shape index: {1}]
  %s8 = inlined_call_operand.vmem [shape: f32[16,128], index: 8, kind: output, shape index: {2}]
  %9 = xla_tuple %s6, %s7, %s8
  %s10 = sld [smem:[#allocation0]]
  $region50: #{moco_forward.5} parent=0
    _
  %s12 = ssub.s32 1, %s10
  %s13 = scalar_select 0, %s12, %s10
  // Predicated region
  $region2: #{moco_forward.5} parent=0 // pred_check
    _
  $region3: #{moco_forward.5} parent=0 // pred_check_branch
    %15 = sbr.rel (0) target = $region5
  $region4: #{moco_forward.5} parent=0 // pred_region
    _
  $region5: #{moco_forward.5} parent=0 // pred_fallthru
    _
  // Predicated region
  $region6: #{moco_forward.5} parent=0 // pred_check
    _
  $region7: #{moco_forward.5} parent=0 // pred_check_branch
    %17 = sbr.rel (0) target = $region9
  $region8: #{moco_forward.5} parent=0 // pred_region
    _
  $region9: #{moco_forward.5} parent=0 // pred_fallthru
    _
  // Predicated region
  $region10: #{moco_forward.5} parent=0 // pred_check
    _
  $region11: #{moco_forward.5} parent=0 // pred_check_branch
    %19 = sbr.rel (0) target = $region13
  $region12: #{moco_forward.5} parent=0 // pred_region
    _
  $region13: #{moco_forward.5} parent=0 // pred_fallthru
    _
  // Predicated region
  $region14: #{moco_forward.5} parent=0 // pred_check
    _
  $region15: #{moco_forward.5} parent=0 // pred_check_branch
    %21 = sbr.rel (0) target = $region17
  $region16: #{moco_forward.5} parent=0 // pred_region
    _
  $region17: #{moco_forward.5} parent=0 // pred_fallthru
    _
  // Predicated region
  $region18: #{moco_forward.5} parent=0 // pred_check
    _
  $region19: #{moco_forward.5} parent=0 // pred_check_branch
    %23 = sbr.rel (0) target = $region21
  $region20: #{moco_forward.5} parent=0 // pred_region
    _
  $region21: #{moco_forward.5} parent=0 // pred_fallthru
    _
  // Predicated region
  $region22: #{moco_forward.5} parent=0 // pred_check
    _
  $region23: #{moco_forward.5} parent=0 // pred_check_branch
    %25 = sbr.rel (0) target = $region25
  $region24: #{moco_forward.5} parent=0 // pred_region
    _
  $region25: #{moco_forward.5} parent=0 // pred_fallthru
    _
  %v27 = vld [vmem:[%s0] sm:$0xff]
  %v28 = vld [vmem:[%s0 + $0x8] sm:$0xff]
  %v29 = vld [vmem:[%s0 + $0x10] sm:$0xff]
  %v30 = vld [vmem:[%s0 + $0x18] sm:$0xff]
  %v31 = vld [vmem:[%s0 + $0x20] sm:$0xff]
  %v32 = vld [vmem:[%s0 + $0x28] sm:$0xff]
  %v33 = vld [vmem:[%s0 + $0x30] sm:$0xff]
  %v34 = vld [vmem:[%s0 + $0x38] sm:$0xff]
  %v35 = vld [vmem:[%s0 + $0x40] sm:$0xff]
  %v36 = vld [vmem:[%s0 + $0x48] sm:$0xff]
  %v37 = vld [vmem:[%s0 + $0x50] sm:$0xff]
  %v38 = vld [vmem:[%s0 + $0x58] sm:$0xff]
  %v39 = vld [vmem:[%s0 + $0x60] sm:$0xff]
  %v40 = vld [vmem:[%s0 + $0x68] sm:$0xff]
  %v41 = vld [vmem:[%s0 + $0x70] sm:$0xff]
  %v42 = vld [vmem:[%s0 + $0x78] sm:$0xff]
  %v43 = vpack.c.bf16 %v35, %v27
  %v44 = vpack.c.bf16 %v36, %v28
  %v45 = vpack.c.bf16 %v37, %v29
  %v46 = vpack.c.bf16 %v38, %v30
  %v47 = vpack.c.bf16 %v39, %v31
  %v48 = vpack.c.bf16 %v40, %v32
  %v49 = vpack.c.bf16 %v41, %v33
  %v50 = vpack.c.bf16 %v42, %v34
  %v51 = vld [vmem:[%s2] sm:$0xf]
  %v52 = vld [vmem:[%s2 + $0x4] sm:$0xf]
  %v53 = vld [vmem:[%s2 + $0x8] sm:$0xf]
  %v54 = vld [vmem:[%s2 + $0xc] sm:$0xf]
  %v55 = vld [vmem:[%s2 + $0x10] sm:$0xf]
  %v56 = vld [vmem:[%s2 + $0x14] sm:$0xf]
  %v57 = vld [vmem:[%s2 + $0x18] sm:$0xf]
  %v58 = vld [vmem:[%s2 + $0x1c] sm:$0xf]
  %v59 = vld [vmem:[%s2 + $0x20] sm:$0xf]
  %v60 = vld [vmem:[%s2 + $0x24] sm:$0xf]
  %v61 = vld [vmem:[%s2 + $0x28] sm:$0xf]
  %v62 = vld [vmem:[%s2 + $0x2c] sm:$0xf]
  %v63 = vld [vmem:[%s2 + $0x30] sm:$0xf]
  %v64 = vld [vmem:[%s2 + $0x34] sm:$0xf]
  %v65 = vld [vmem:[%s2 + $0x38] sm:$0xf]
  %v66 = vld [vmem:[%s2 + $0x3c] sm:$0xf]
  %v67 = vld [vmem:[%s2 + $0x40] sm:$0xf]
  %v68 = vld [vmem:[%s2 + $0x44] sm:$0xf]
  %v69 = vld [vmem:[%s2 + $0x48] sm:$0xf]
  %v70 = vld [vmem:[%s2 + $0x4c] sm:$0xf]
  %v71 = vld [vmem:[%s2 + $0x50] sm:$0xf]
  %v72 = vld [vmem:[%s2 + $0x54] sm:$0xf]
  %v73 = vld [vmem:[%s2 + $0x58] sm:$0xf]
  %v74 = vld [vmem:[%s2 + $0x5c] sm:$0xf]
  %v75 = vld [vmem:[%s2 + $0x60] sm:$0xf]
  %v76 = vld [vmem:[%s2 + $0x64] sm:$0xf]
  %v77 = vld [vmem:[%s2 + $0x68] sm:$0xf]
  %v78 = vld [vmem:[%s2 + $0x6c] sm:$0xf]
  %v79 = vld [vmem:[%s2 + $0x70] sm:$0xf]
  %v80 = vld [vmem:[%s2 + $0x74] sm:$0xf]
  %v81 = vld [vmem:[%s2 + $0x78] sm:$0xf]
  %v82 = vld [vmem:[%s2 + $0x7c] sm:$0xf]
  %v83 = vld [vmem:[%s2 + $0x80] sm:$0xf]
  %v84 = vld [vmem:[%s2 + $0x84] sm:$0xf]
  %v85 = vld [vmem:[%s2 + $0x88] sm:$0xf]
  %v86 = vld [vmem:[%s2 + $0x8c] sm:$0xf]
  %v87 = vld [vmem:[%s2 + $0x90] sm:$0xf]
  %v88 = vld [vmem:[%s2 + $0x94] sm:$0xf]
  %v89 = vld [vmem:[%s2 + $0x98] sm:$0xf]
  %v90 = vld [vmem:[%s2 + $0x9c] sm:$0xf]
  %v91 = vld [vmem:[%s2 + $0xa0] sm:$0xf]
  %v92 = vld [vmem:[%s2 + $0xa4] sm:$0xf]
  %v93 = vld [vmem:[%s2 + $0xa8] sm:$0xf]
  %v94 = vld [vmem:[%s2 + $0xac] sm:$0xf]
  %v95 = vld [vmem:[%s2 + $0xb0] sm:$0xf]
  %v96 = vld [vmem:[%s2 + $0xb4] sm:$0xf]
  %v97 = vld [vmem:[%s2 + $0xb8] sm:$0xf]
  %v98 = vld [vmem:[%s2 + $0xbc] sm:$0xf]
  %v99 = vld [vmem:[%s2 + $0xc0] sm:$0xf]
  %v100 = vld [vmem:[%s2 + $0xc4] sm:$0xf]
  %v101 = vld [vmem:[%s2 + $0xc8] sm:$0xf]
  %v102 = vld [vmem:[%s2 + $0xcc] sm:$0xf]
  %v103 = vld [vmem:[%s2 + $0xd0] sm:$0xf]
  %v104 = vld [vmem:[%s2 + $0xd4] sm:$0xf]
  %v105 = vld [vmem:[%s2 + $0xd8] sm:$0xf]
  %v106 = vld [vmem:[%s2 + $0xdc] sm:$0xf]
  %v107 = vld [vmem:[%s2 + $0xe0] sm:$0xf]
  %v108 = vld [vmem:[%s2 + $0xe4] sm:$0xf]
  %v109 = vld [vmem:[%s2 + $0xe8] sm:$0xf]
  %v110 = vld [vmem:[%s2 + $0xec] sm:$0xf]
  %v111 = vld [vmem:[%s2 + $0xf0] sm:$0xf]
  %v112 = vld [vmem:[%s2 + $0xf4] sm:$0xf]
  %v113 = vld [vmem:[%s2 + $0xf8] sm:$0xf]
  %v114 = vld [vmem:[%s2 + $0xfc] sm:$0xf]
  %v115 = vld [vmem:[%s2 + $0x100] sm:$0xf]
  %v116 = vld [vmem:[%s2 + $0x104] sm:$0xf]
  %v117 = vld [vmem:[%s2 + $0x108] sm:$0xf]
  %v118 = vld [vmem:[%s2 + $0x10c] sm:$0xf]
  %v119 = vld [vmem:[%s2 + $0x110] sm:$0xf]
  %v120 = vld [vmem:[%s2 + $0x114] sm:$0xf]
  %v121 = vld [vmem:[%s2 + $0x118] sm:$0xf]
  %v122 = vld [vmem:[%s2 + $0x11c] sm:$0xf]
  %v123 = vld [vmem:[%s2 + $0x120] sm:$0xf]
  %v124 = vld [vmem:[%s2 + $0x124] sm:$0xf]
  %v125 = vld [vmem:[%s2 + $0x128] sm:$0xf]
  %v126 = vld [vmem:[%s2 + $0x12c] sm:$0xf]
  %v127 = vld [vmem:[%s2 + $0x130] sm:$0xf]
  %v128 = vld [vmem:[%s2 + $0x134] sm:$0xf]
  %v129 = vld [vmem:[%s2 + $0x138] sm:$0xf]
  %v130 = vld [vmem:[%s2 + $0x13c] sm:$0xf]
  %v131 = vld [vmem:[%s2 + $0x140] sm:$0xf]
  %v132 = vld [vmem:[%s2 + $0x144] sm:$0xf]
  %v133 = vld [vmem:[%s2 + $0x148] sm:$0xf]
  %v134 = vld [vmem:[%s2 + $0x14c] sm:$0xf]
  %v135 = vld [vmem:[%s2 + $0x150] sm:$0xf]
  %v136 = vld [vmem:[%s2 + $0x154] sm:$0xf]
  %v137 = vld [vmem:[%s2 + $0x158] sm:$0xf]
  %v138 = vld [vmem:[%s2 + $0x15c] sm:$0xf]
  %v139 = vld [vmem:[%s2 + $0x160] sm:$0xf]
  %v140 = vld [vmem:[%s2 + $0x164] sm:$0xf]
  %v141 = vld [vmem:[%s2 + $0x168] sm:$0xf]
  %v142 = vld [vmem:[%s2 + $0x16c] sm:$0xf]
  %v143 = vld [vmem:[%s2 + $0x170] sm:$0xf]
  %v144 = vld [vmem:[%s2 + $0x174] sm:$0xf]
  %v145 = vld [vmem:[%s2 + $0x178] sm:$0xf]
  %v146 = vld [vmem:[%s2 + $0x17c] sm:$0xf]
  %v147 = vld [vmem:[%s2 + $0x180] sm:$0xf]
  %v148 = vld [vmem:[%s2 + $0x184] sm:$0xf]
  %v149 = vld [vmem:[%s2 + $0x188] sm:$0xf]
  %v150 = vld [vmem:[%s2 + $0x18c] sm:$0xf]
  %v151 = vld [vmem:[%s2 + $0x190] sm:$0xf]
  %v152 = vld [vmem:[%s2 + $0x194] sm:$0xf]
  %v153 = vld [vmem:[%s2 + $0x198] sm:$0xf]
  %v154 = vld [vmem:[%s2 + $0x19c] sm:$0xf]
  %v155 = vld [vmem:[%s2 + $0x1a0] sm:$0xf]
  %v156 = vld [vmem:[%s2 + $0x1a4] sm:$0xf]
  %v157 = vld [vmem:[%s2 + $0x1a8] sm:$0xf]
  %v158 = vld [vmem:[%s2 + $0x1ac] sm:$0xf]
  %v159 = vld [vmem:[%s2 + $0x1b0] sm:$0xf]
  %v160 = vld [vmem:[%s2 + $0x1b4] sm:$0xf]
  %v161 = vld [vmem:[%s2 + $0x1b8] sm:$0xf]
  %v162 = vld [vmem:[%s2 + $0x1bc] sm:$0xf]
  %v163 = vld [vmem:[%s2 + $0x1c0] sm:$0xf]
  %v164 = vld [vmem:[%s2 + $0x1c4] sm:$0xf]
  %v165 = vld [vmem:[%s2 + $0x1c8] sm:$0xf]
  %v166 = vld [vmem:[%s2 + $0x1cc] sm:$0xf]
  %v167 = vld [vmem:[%s2 + $0x1d0] sm:$0xf]
  %v168 = vld [vmem:[%s2 + $0x1d4] sm:$0xf]
  %v169 = vld [vmem:[%s2 + $0x1d8] sm:$0xf]
  %v170 = vld [vmem:[%s2 + $0x1dc] sm:$0xf]
  %v171 = vld [vmem:[%s2 + $0x1e0] sm:$0xf]
  %v172 = vld [vmem:[%s2 + $0x1e4] sm:$0xf]
  %v173 = vld [vmem:[%s2 + $0x1e8] sm:$0xf]
  %v174 = vld [vmem:[%s2 + $0x1ec] sm:$0xf]
  %v175 = vld [vmem:[%s2 + $0x1f0] sm:$0xf]
  %v176 = vld [vmem:[%s2 + $0x1f4] sm:$0xf]
  %v177 = vld [vmem:[%s2 + $0x1f8] sm:$0xf]
  %v178 = vld [vmem:[%s2 + $0x1fc] sm:$0xf]
  %v179 = vld [vmem:[%s3] sm:$0x1]
  %v181 = vlaneseq
  %v182 = vshrl.u32 %v181, 7
  %v183 = vsub.s32 0, %v182
  %v184 = vrot.slane %v179, %v183
  %v314 = vunpack.c.l.b16 %v51
  %v315 = vunpack.c.l.b16 %v52
  %v316 = vunpack.c.l.b16 %v53
  %v317 = vunpack.c.l.b16 %v54
  %v318 = vunpack.c.l.b16 %v55
  %v319 = vunpack.c.l.b16 %v56
  %v320 = vunpack.c.l.b16 %v57
  %v321 = vunpack.c.l.b16 %v58
  %v322 = vunpack.c.l.b16 %v59
  %v323 = vunpack.c.l.b16 %v60
  %v324 = vunpack.c.l.b16 %v61
  %v325 = vunpack.c.l.b16 %v62
  %v326 = vunpack.c.l.b16 %v63
  %v327 = vunpack.c.l.b16 %v64
  %v328 = vunpack.c.l.b16 %v65
  %v329 = vunpack.c.l.b16 %v66
  %v330 = vunpack.c.l.b16 %v67
  %v331 = vunpack.c.l.b16 %v68
  %v332 = vunpack.c.l.b16 %v69
  %v333 = vunpack.c.l.b16 %v70
  %v334 = vunpack.c.l.b16 %v71
  %v335 = vunpack.c.l.b16 %v72
  %v336 = vunpack.c.l.b16 %v73
  %v337 = vunpack.c.l.b16 %v74
  %v338 = vunpack.c.l.b16 %v75
  %v339 = vunpack.c.l.b16 %v76
  %v340 = vunpack.c.l.b16 %v77
  %v341 = vunpack.c.l.b16 %v78
  %v342 = vunpack.c.l.b16 %v79
  %v343 = vunpack.c.l.b16 %v80
  %v344 = vunpack.c.l.b16 %v81
  %v345 = vunpack.c.l.b16 %v82
  %v346 = vunpack.c.l.b16 %v83
  %v347 = vunpack.c.l.b16 %v84
  %v348 = vunpack.c.l.b16 %v85
  %v349 = vunpack.c.l.b16 %v86
  %v350 = vunpack.c.l.b16 %v87
  %v351 = vunpack.c.l.b16 %v88
  %v352 = vunpack.c.l.b16 %v89
  %v353 = vunpack.c.l.b16 %v90
  %v354 = vunpack.c.l.b16 %v91
  %v355 = vunpack.c.l.b16 %v92
  %v356 = vunpack.c.l.b16 %v93
  %v357 = vunpack.c.l.b16 %v94
  %v358 = vunpack.c.l.b16 %v95
  %v359 = vunpack.c.l.b16 %v96
  %v360 = vunpack.c.l.b16 %v97
  %v361 = vunpack.c.l.b16 %v98
  %v362 = vunpack.c.l.b16 %v99
  %v363 = vunpack.c.l.b16 %v100
  %v364 = vunpack.c.l.b16 %v101
  %v365 = vunpack.c.l.b16 %v102
  %v366 = vunpack.c.l.b16 %v103
  %v367 = vunpack.c.l.b16 %v104
  %v368 = vunpack.c.l.b16 %v105
  %v369 = vunpack.c.l.b16 %v106
  %v370 = vunpack.c.l.b16 %v107
  %v371 = vunpack.c.l.b16 %v108
  %v372 = vunpack.c.l.b16 %v109
  %v373 = vunpack.c.l.b16 %v110
  %v374 = vunpack.c.l.b16 %v111
  %v375 = vunpack.c.l.b16 %v112
  %v376 = vunpack.c.l.b16 %v113
  %v377 = vunpack.c.l.b16 %v114
  %v378 = vunpack.c.l.b16 %v115
  %v379 = vunpack.c.l.b16 %v116
  %v380 = vunpack.c.l.b16 %v117
  %v381 = vunpack.c.l.b16 %v118
  %v382 = vunpack.c.l.b16 %v119
  %v383 = vunpack.c.l.b16 %v120
  %v384 = vunpack.c.l.b16 %v121
  %v385 = vunpack.c.l.b16 %v122
  %v386 = vunpack.c.l.b16 %v123
  %v387 = vunpack.c.l.b16 %v124
  %v388 = vunpack.c.l.b16 %v125
  %v389 = vunpack.c.l.b16 %v126
  %v390 = vunpack.c.l.b16 %v127
  %v391 = vunpack.c.l.b16 %v128
  %v392 = vunpack.c.l.b16 %v129
  %v393 = vunpack.c.l.b16 %v130
  %v394 = vunpack.c.l.b16 %v131
  %v395 = vunpack.c.l.b16 %v132
  %v396 = vunpack.c.l.b16 %v133
  %v397 = vunpack.c.l.b16 %v134
  %v398 = vunpack.c.l.b16 %v135
  %v399 = vunpack.c.l.b16 %v136
  %v400 = vunpack.c.l.b16 %v137
  %v401 = vunpack.c.l.b16 %v138
  %v402 = vunpack.c.l.b16 %v139
  %v403 = vunpack.c.l.b16 %v140
  %v404 = vunpack.c.l.b16 %v141
  %v405 = vunpack.c.l.b16 %v142
  %v406 = vunpack.c.l.b16 %v143
  %v407 = vunpack.c.l.b16 %v144
  %v408 = vunpack.c.l.b16 %v145
  %v409 = vunpack.c.l.b16 %v146
  %v410 = vunpack.c.l.b16 %v147
  %v411 = vunpack.c.l.b16 %v148
  %v412 = vunpack.c.l.b16 %v149
  %v413 = vunpack.c.l.b16 %v150
  %v414 = vunpack.c.l.b16 %v151
  %v415 = vunpack.c.l.b16 %v152
  %v416 = vunpack.c.l.b16 %v153
  %v417 = vunpack.c.l.b16 %v154
  %v418 = vunpack.c.l.b16 %v155
  %v419 = vunpack.c.l.b16 %v156
  %v420 = vunpack.c.l.b16 %v157
  %v421 = vunpack.c.l.b16 %v158
  %v422 = vunpack.c.l.b16 %v159
  %v423 = vunpack.c.l.b16 %v160
  %v424 = vunpack.c.l.b16 %v161
  %v425 = vunpack.c.l.b16 %v162
  %v426 = vunpack.c.l.b16 %v163
  %v427 = vunpack.c.l.b16 %v164
  %v428 = vunpack.c.l.b16 %v165
  %v429 = vunpack.c.l.b16 %v166
  %v430 = vunpack.c.l.b16 %v167
  %v431 = vunpack.c.l.b16 %v168
  %v432 = vunpack.c.l.b16 %v169
  %v433 = vunpack.c.l.b16 %v170
  %v434 = vunpack.c.l.b16 %v171
  %v435 = vunpack.c.l.b16 %v172
  %v436 = vunpack.c.l.b16 %v173
  %v437 = vunpack.c.l.b16 %v174
  %v438 = vunpack.c.l.b16 %v175
  %v439 = vunpack.c.l.b16 %v176
  %v440 = vunpack.c.l.b16 %v177
  %v441 = vunpack.c.l.b16 %v178
  %v442 = vpack.c.b16 %v315, %v314
  %v443 = vpack.c.b16 %v317, %v316
  %v444 = vpack.c.b16 %v319, %v318
  %v445 = vpack.c.b16 %v321, %v320
  %v446 = vpack.c.b16 %v323, %v322
  %v447 = vpack.c.b16 %v325, %v324
  %v448 = vpack.c.b16 %v327, %v326
  %v449 = vpack.c.b16 %v329, %v328
  %v450 = vpack.c.b16 %v331, %v330
  %v451 = vpack.c.b16 %v333, %v332
  %v452 = vpack.c.b16 %v335, %v334
  %v453 = vpack.c.b16 %v337, %v336
  %v454 = vpack.c.b16 %v339, %v338
  %v455 = vpack.c.b16 %v341, %v340
  %v456 = vpack.c.b16 %v343, %v342
  %v457 = vpack.c.b16 %v345, %v344
  %v458 = vpack.c.b16 %v347, %v346
  %v459 = vpack.c.b16 %v349, %v348
  %v460 = vpack.c.b16 %v351, %v350
  %v461 = vpack.c.b16 %v353, %v352
  %v462 = vpack.c.b16 %v355, %v354
  %v463 = vpack.c.b16 %v357, %v356
  %v464 = vpack.c.b16 %v359, %v358
  %v465 = vpack.c.b16 %v361, %v360
  %v466 = vpack.c.b16 %v363, %v362
  %v467 = vpack.c.b16 %v365, %v364
  %v468 = vpack.c.b16 %v367, %v366
  %v469 = vpack.c.b16 %v369, %v368
  %v470 = vpack.c.b16 %v371, %v370
  %v471 = vpack.c.b16 %v373, %v372
  %v472 = vpack.c.b16 %v375, %v374
  %v473 = vpack.c.b16 %v377, %v376
  %v474 = vpack.c.b16 %v379, %v378
  %v475 = vpack.c.b16 %v381, %v380
  %v476 = vpack.c.b16 %v383, %v382
  %v477 = vpack.c.b16 %v385, %v384
  %v478 = vpack.c.b16 %v387, %v386
  %v479 = vpack.c.b16 %v389, %v388
  %v480 = vpack.c.b16 %v391, %v390
  %v481 = vpack.c.b16 %v393, %v392
  %v482 = vpack.c.b16 %v395, %v394
  %v483 = vpack.c.b16 %v397, %v396
  %v484 = vpack.c.b16 %v399, %v398
  %v485 = vpack.c.b16 %v401, %v400
  %v486 = vpack.c.b16 %v403, %v402
  %v487 = vpack.c.b16 %v405, %v404
  %v488 = vpack.c.b16 %v407, %v406
  %v489 = vpack.c.b16 %v409, %v408
  %v490 = vpack.c.b16 %v411, %v410
  %v491 = vpack.c.b16 %v413, %v412
  %v492 = vpack.c.b16 %v415, %v414
  %v493 = vpack.c.b16 %v417, %v416
  %v494 = vpack.c.b16 %v419, %v418
  %v495 = vpack.c.b16 %v421, %v420
  %v496 = vpack.c.b16 %v423, %v422
  %v497 = vpack.c.b16 %v425, %v424
  %v498 = vpack.c.b16 %v427, %v426
  %v499 = vpack.c.b16 %v429, %v428
  %v500 = vpack.c.b16 %v431, %v430
  %v501 = vpack.c.b16 %v433, %v432
  %v502 = vpack.c.b16 %v435, %v434
  %v503 = vpack.c.b16 %v437, %v436
  %v504 = vpack.c.b16 %v439, %v438
  %v505 = vpack.c.b16 %v441, %v440
  %570 = vmatprep.subr.bf16.mxu0 0
  %571 = vmatpush1.bf16.msra.mxu0 %v449
  %572 = vmatprep.subr.bf16.mxu0 0
  %573 = vmatpush1.bf16.msra.mxu0 %v448
  %574 = vmatprep.subr.bf16.mxu0 0
  %575 = vmatpush1.bf16.msra.mxu0 %v447
  %576 = vmatprep.subr.bf16.mxu0 0
  %577 = vmatpush1.bf16.msra.mxu0 %v446
  %578 = vmatprep.subr.bf16.mxu0 0
  %579 = vmatpush1.bf16.msra.mxu0 %v445
  %580 = vmatprep.subr.bf16.mxu0 0
  %581 = vmatpush1.bf16.msra.mxu0 %v444
  %582 = vmatprep.subr.bf16.mxu0 0
  %583 = vmatpush1.bf16.msra.mxu0 %v443
  %584 = vmatprep.subr.bf16.mxu0 0
  %585 = vmatpush1.bf16.msra.mxu0 %v442
  %586 = vmatprep.subr.bf16.mxu0 0
  %587 = vmatpush2.bf16.msra.mxu0 %v457
  %588 = vmatprep.subr.bf16.mxu0 0
  %589 = vmatpush2.bf16.msra.mxu0 %v456
  %590 = vmatprep.subr.bf16.mxu0 0
  %591 = vmatpush2.bf16.msra.mxu0 %v455
  %592 = vmatprep.subr.bf16.mxu0 0
  %593 = vmatpush2.bf16.msra.mxu0 %v454
  %594 = vmatprep.subr.bf16.mxu0 0
  %595 = vmatpush2.bf16.msra.mxu0 %v453
  %596 = vmatprep.subr.bf16.mxu0 0
  %597 = vmatpush2.bf16.msra.mxu0 %v452
  %598 = vmatprep.subr.bf16.mxu0 0
  %599 = vmatpush2.bf16.msra.mxu0 %v451
  %600 = vmatprep.subr.bf16.mxu0 0
  %601 = vmatpush2.bf16.msra.mxu0 %v450
  %602 = vmatprep.mubr.bf16.mxu0 %v44
  %603 = vmatmul.mubr.bf16.gmra.mxu0 %v43
  %v604 = vpop.f32.mrf.mxu0
  %v605 = vadd.f32 %v184, %v604
  %v606 = vpop.f32.mrf.mxu0
  %v607 = vpop.f32.mrf.mxu0
  %v608 = vadd.f32 %v184, %v607
  %v609 = vpop.f32.mrf.mxu0
  %610 = vdwg.mxu0
  %611 = vmatprep.subr.bf16.mxu0 0
  %612 = vmatpush1.bf16.msra.mxu0 %v465
  %613 = vmatprep.subr.bf16.mxu0 0
  %614 = vmatpush1.bf16.msra.mxu0 %v464
  %615 = vmatprep.subr.bf16.mxu0 0
  %616 = vmatpush1.bf16.msra.mxu0 %v463
  %617 = vmatprep.subr.bf16.mxu0 0
  %618 = vmatpush1.bf16.msra.mxu0 %v462
  %619 = vmatprep.subr.bf16.mxu0 0
  %620 = vmatpush1.bf16.msra.mxu0 %v461
  %621 = vmatprep.subr.bf16.mxu0 0
  %622 = vmatpush1.bf16.msra.mxu0 %v460
  %623 = vmatprep.subr.bf16.mxu0 0
  %624 = vmatpush1.bf16.msra.mxu0 %v459
  %625 = vmatprep.subr.bf16.mxu0 0
  %626 = vmatpush1.bf16.msra.mxu0 %v458
  %627 = vmatprep.subr.bf16.mxu0 0
  %628 = vmatpush2.bf16.msra.mxu0 %v473
  %629 = vmatprep.subr.bf16.mxu0 0
  %630 = vmatpush2.bf16.msra.mxu0 %v472
  %631 = vmatprep.subr.bf16.mxu0 0
  %632 = vmatpush2.bf16.msra.mxu0 %v471
  %633 = vmatprep.subr.bf16.mxu0 0
  %634 = vmatpush2.bf16.msra.mxu0 %v470
  %635 = vmatprep.subr.bf16.mxu0 0
  %636 = vmatpush2.bf16.msra.mxu0 %v469
  %637 = vmatprep.subr.bf16.mxu0 0
  %638 = vmatpush2.bf16.msra.mxu0 %v468
  %639 = vmatprep.subr.bf16.mxu0 0
  %640 = vmatpush2.bf16.msra.mxu0 %v467
  %641 = vmatprep.subr.bf16.mxu0 0
  %642 = vmatpush2.bf16.msra.mxu0 %v466
  %643 = vmatprep.mubr.bf16.mxu0 %v46
  %644 = vmatmul.mubr.bf16.gmra.mxu0 %v45
  %v645 = vpop.f32.mrf.mxu0
  %v646 = vadd.f32 %v605, %v645
  %v647 = vpop.f32.mrf.mxu0
  %v648 = vpop.f32.mrf.mxu0
  %v649 = vadd.f32 %v608, %v648
  %v650 = vpop.f32.mrf.mxu0
  %651 = vdwg.mxu0
  %652 = vmatprep.subr.bf16.mxu0 0
  %653 = vmatpush1.bf16.msra.mxu0 %v481
  %654 = vmatprep.subr.bf16.mxu0 0
  %655 = vmatpush1.bf16.msra.mxu0 %v480
  %656 = vmatprep.subr.bf16.mxu0 0
  %657 = vmatpush1.bf16.msra.mxu0 %v479
  %658 = vmatprep.subr.bf16.mxu0 0
  %659 = vmatpush1.bf16.msra.mxu0 %v478
  %660 = vmatprep.subr.bf16.mxu0 0
  %661 = vmatpush1.bf16.msra.mxu0 %v477
  %662 = vmatprep.subr.bf16.mxu0 0
  %663 = vmatpush1.bf16.msra.mxu0 %v476
  %664 = vmatprep.subr.bf16.mxu0 0
  %665 = vmatpush1.bf16.msra.mxu0 %v475
  %666 = vmatprep.subr.bf16.mxu0 0
  %667 = vmatpush1.bf16.msra.mxu0 %v474
  %668 = vmatprep.subr.bf16.mxu0 0
  %669 = vmatpush2.bf16.msra.mxu0 %v489
  %670 = vmatprep.subr.bf16.mxu0 0
  %671 = vmatpush2.bf16.msra.mxu0 %v488
  %672 = vmatprep.subr.bf16.mxu0 0
  %673 = vmatpush2.bf16.msra.mxu0 %v487
  %674 = vmatprep.subr.bf16.mxu0 0
  %675 = vmatpush2.bf16.msra.mxu0 %v486
  %676 = vmatprep.subr.bf16.mxu0 0
  %677 = vmatpush2.bf16.msra.mxu0 %v485
  %678 = vmatprep.subr.bf16.mxu0 0
  %679 = vmatpush2.bf16.msra.mxu0 %v484
  %680 = vmatprep.subr.bf16.mxu0 0
  %681 = vmatpush2.bf16.msra.mxu0 %v483
  %682 = vmatprep.subr.bf16.mxu0 0
  %683 = vmatpush2.bf16.msra.mxu0 %v482
  %684 = vmatprep.mubr.bf16.mxu0 %v48
  %685 = vmatmul.mubr.bf16.gmra.mxu0 %v47
  %v686 = vpop.f32.mrf.mxu0
  %v687 = vadd.f32 %v646, %v686
  %v688 = vpop.f32.mrf.mxu0
  %v689 = vpop.f32.mrf.mxu0
  %v690 = vadd.f32 %v649, %v689
  %v691 = vpop.f32.mrf.mxu0
  %692 = vdwg.mxu0
  %693 = vmatprep.subr.bf16.mxu0 0
  %694 = vmatpush1.bf16.msra.mxu0 %v497
  %695 = vmatprep.subr.bf16.mxu0 0
  %696 = vmatpush1.bf16.msra.mxu0 %v496
  %697 = vmatprep.subr.bf16.mxu0 0
  %698 = vmatpush1.bf16.msra.mxu0 %v495
  %699 = vmatprep.subr.bf16.mxu0 0
  %700 = vmatpush1.bf16.msra.mxu0 %v494
  %701 = vmatprep.subr.bf16.mxu0 0
  %702 = vmatpush1.bf16.msra.mxu0 %v493
  %703 = vmatprep.subr.bf16.mxu0 0
  %704 = vmatpush1.bf16.msra.mxu0 %v492
  %705 = vmatprep.subr.bf16.mxu0 0
  %706 = vmatpush1.bf16.msra.mxu0 %v491
  %707 = vmatprep.subr.bf16.mxu0 0
  %708 = vmatpush1.bf16.msra.mxu0 %v490
  %709 = vmatprep.subr.bf16.mxu0 0
  %710 = vmatpush2.bf16.msra.mxu0 %v505
  %711 = vmatprep.subr.bf16.mxu0 0
  %712 = vmatpush2.bf16.msra.mxu0 %v504
  %713 = vmatprep.subr.bf16.mxu0 0
  %714 = vmatpush2.bf16.msra.mxu0 %v503
  %715 = vmatprep.subr.bf16.mxu0 0
  %716 = vmatpush2.bf16.msra.mxu0 %v502
  %717 = vmatprep.subr.bf16.mxu0 0
  %718 = vmatpush2.bf16.msra.mxu0 %v501
  %719 = vmatprep.subr.bf16.mxu0 0
  %720 = vmatpush2.bf16.msra.mxu0 %v500
  %721 = vmatprep.subr.bf16.mxu0 0
  %722 = vmatpush2.bf16.msra.mxu0 %v499
  %723 = vmatprep.subr.bf16.mxu0 0
  %724 = vmatpush2.bf16.msra.mxu0 %v498
  %725 = vmatprep.mubr.bf16.mxu0 %v50
  %726 = vmatmul.mubr.bf16.gmra.mxu0 %v49
  %v727 = vpop.f32.mrf.mxu0
  %v728 = vadd.f32 %v687, %v727
  %v729 = vpop.f32.mrf.mxu0
  %v730 = vpop.f32.mrf.mxu0
  %v731 = vadd.f32 %v690, %v730
  %v732 = vpop.f32.mrf.mxu0
  %733 = vdwg.mxu0
  %v734 = vmul.f32 %v728, %v728
  %v735 = vmul.f32 %v731, %v731
  %736 = vadd.xlane.f32.xlu0 %v734
  %v737 = vpop.xlane.xlu0 %736
  %738 = vadd.xlane.f32.xlu0 %v735
  %v739 = vpop.xlane.xlu0 %738
  %v740 = vmax.f32 %v737, 1e-24
  %v741 = vmax.f32 %v739, 1e-24
  %v742 = vrsqrt.pop %v740
  %v743 = vrsqrt.pop %v741
  %v744 = vmul.f32 %v728, %v742
  %v745 = vmul.f32 %v731, %v743
  %v746 = vld [vmem:[%s1] sm:$0xff]
  %v747 = vld [vmem:[%s1 + $0x8] sm:$0xff]
  %v748 = vld [vmem:[%s1 + $0x10] sm:$0xff]
  %v749 = vld [vmem:[%s1 + $0x18] sm:$0xff]
  %v750 = vld [vmem:[%s1 + $0x20] sm:$0xff]
  %v751 = vld [vmem:[%s1 + $0x28] sm:$0xff]
  %v752 = vld [vmem:[%s1 + $0x30] sm:$0xff]
  %v753 = vld [vmem:[%s1 + $0x38] sm:$0xff]
  %v754 = vld [vmem:[%s1 + $0x40] sm:$0xff]
  %v755 = vld [vmem:[%s1 + $0x48] sm:$0xff]
  %v756 = vld [vmem:[%s1 + $0x50] sm:$0xff]
  %v757 = vld [vmem:[%s1 + $0x58] sm:$0xff]
  %v758 = vld [vmem:[%s1 + $0x60] sm:$0xff]
  %v759 = vld [vmem:[%s1 + $0x68] sm:$0xff]
  %v760 = vld [vmem:[%s1 + $0x70] sm:$0xff]
  %v761 = vld [vmem:[%s1 + $0x78] sm:$0xff]
  %v762 = vpack.c.bf16 %v754, %v746
  %v763 = vpack.c.bf16 %v755, %v747
  %v764 = vpack.c.bf16 %v756, %v748
  %v765 = vpack.c.bf16 %v757, %v749
  %v766 = vpack.c.bf16 %v758, %v750
  %v767 = vpack.c.bf16 %v759, %v751
  %v768 = vpack.c.bf16 %v760, %v752
  %v769 = vpack.c.bf16 %v761, %v753
  %v770 = vld [vmem:[%s4] sm:$0xf]
  %v771 = vld [vmem:[%s4 + $0x4] sm:$0xf]
  %v772 = vld [vmem:[%s4 + $0x8] sm:$0xf]
  %v773 = vld [vmem:[%s4 + $0xc] sm:$0xf]
  %v774 = vld [vmem:[%s4 + $0x10] sm:$0xf]
  %v775 = vld [vmem:[%s4 + $0x14] sm:$0xf]
  %v776 = vld [vmem:[%s4 + $0x18] sm:$0xf]
  %v777 = vld [vmem:[%s4 + $0x1c] sm:$0xf]
  %v778 = vld [vmem:[%s4 + $0x20] sm:$0xf]
  %v779 = vld [vmem:[%s4 + $0x24] sm:$0xf]
  %v780 = vld [vmem:[%s4 + $0x28] sm:$0xf]
  %v781 = vld [vmem:[%s4 + $0x2c] sm:$0xf]
  %v782 = vld [vmem:[%s4 + $0x30] sm:$0xf]
  %v783 = vld [vmem:[%s4 + $0x34] sm:$0xf]
  %v784 = vld [vmem:[%s4 + $0x38] sm:$0xf]
  %v785 = vld [vmem:[%s4 + $0x3c] sm:$0xf]
  %v786 = vld [vmem:[%s4 + $0x40] sm:$0xf]
  %v787 = vld [vmem:[%s4 + $0x44] sm:$0xf]
  %v788 = vld [vmem:[%s4 + $0x48] sm:$0xf]
  %v789 = vld [vmem:[%s4 + $0x4c] sm:$0xf]
  %v790 = vld [vmem:[%s4 + $0x50] sm:$0xf]
  %v791 = vld [vmem:[%s4 + $0x54] sm:$0xf]
  %v792 = vld [vmem:[%s4 + $0x58] sm:$0xf]
  %v793 = vld [vmem:[%s4 + $0x5c] sm:$0xf]
  %v794 = vld [vmem:[%s4 + $0x60] sm:$0xf]
  %v795 = vld [vmem:[%s4 + $0x64] sm:$0xf]
  %v796 = vld [vmem:[%s4 + $0x68] sm:$0xf]
  %v797 = vld [vmem:[%s4 + $0x6c] sm:$0xf]
  %v798 = vld [vmem:[%s4 + $0x70] sm:$0xf]
  %v799 = vld [vmem:[%s4 + $0x74] sm:$0xf]
  %v800 = vld [vmem:[%s4 + $0x78] sm:$0xf]
  %v801 = vld [vmem:[%s4 + $0x7c] sm:$0xf]
  %v802 = vld [vmem:[%s4 + $0x80] sm:$0xf]
  %v803 = vld [vmem:[%s4 + $0x84] sm:$0xf]
  %v804 = vld [vmem:[%s4 + $0x88] sm:$0xf]
  %v805 = vld [vmem:[%s4 + $0x8c] sm:$0xf]
  %v806 = vld [vmem:[%s4 + $0x90] sm:$0xf]
  %v807 = vld [vmem:[%s4 + $0x94] sm:$0xf]
  %v808 = vld [vmem:[%s4 + $0x98] sm:$0xf]
  %v809 = vld [vmem:[%s4 + $0x9c] sm:$0xf]
  %v810 = vld [vmem:[%s4 + $0xa0] sm:$0xf]
  %v811 = vld [vmem:[%s4 + $0xa4] sm:$0xf]
  %v812 = vld [vmem:[%s4 + $0xa8] sm:$0xf]
  %v813 = vld [vmem:[%s4 + $0xac] sm:$0xf]
  %v814 = vld [vmem:[%s4 + $0xb0] sm:$0xf]
  %v815 = vld [vmem:[%s4 + $0xb4] sm:$0xf]
  %v816 = vld [vmem:[%s4 + $0xb8] sm:$0xf]
  %v817 = vld [vmem:[%s4 + $0xbc] sm:$0xf]
  %v818 = vld [vmem:[%s4 + $0xc0] sm:$0xf]
  %v819 = vld [vmem:[%s4 + $0xc4] sm:$0xf]
  %v820 = vld [vmem:[%s4 + $0xc8] sm:$0xf]
  %v821 = vld [vmem:[%s4 + $0xcc] sm:$0xf]
  %v822 = vld [vmem:[%s4 + $0xd0] sm:$0xf]
  %v823 = vld [vmem:[%s4 + $0xd4] sm:$0xf]
  %v824 = vld [vmem:[%s4 + $0xd8] sm:$0xf]
  %v825 = vld [vmem:[%s4 + $0xdc] sm:$0xf]
  %v826 = vld [vmem:[%s4 + $0xe0] sm:$0xf]
  %v827 = vld [vmem:[%s4 + $0xe4] sm:$0xf]
  %v828 = vld [vmem:[%s4 + $0xe8] sm:$0xf]
  %v829 = vld [vmem:[%s4 + $0xec] sm:$0xf]
  %v830 = vld [vmem:[%s4 + $0xf0] sm:$0xf]
  %v831 = vld [vmem:[%s4 + $0xf4] sm:$0xf]
  %v832 = vld [vmem:[%s4 + $0xf8] sm:$0xf]
  %v833 = vld [vmem:[%s4 + $0xfc] sm:$0xf]
  %v834 = vld [vmem:[%s4 + $0x100] sm:$0xf]
  %v835 = vld [vmem:[%s4 + $0x104] sm:$0xf]
  %v836 = vld [vmem:[%s4 + $0x108] sm:$0xf]
  %v837 = vld [vmem:[%s4 + $0x10c] sm:$0xf]
  %v838 = vld [vmem:[%s4 + $0x110] sm:$0xf]
  %v839 = vld [vmem:[%s4 + $0x114] sm:$0xf]
  %v840 = vld [vmem:[%s4 + $0x118] sm:$0xf]
  %v841 = vld [vmem:[%s4 + $0x11c] sm:$0xf]
  %v842 = vld [vmem:[%s4 + $0x120] sm:$0xf]
  %v843 = vld [vmem:[%s4 + $0x124] sm:$0xf]
  %v844 = vld [vmem:[%s4 + $0x128] sm:$0xf]
  %v845 = vld [vmem:[%s4 + $0x12c] sm:$0xf]
  %v846 = vld [vmem:[%s4 + $0x130] sm:$0xf]
  %v847 = vld [vmem:[%s4 + $0x134] sm:$0xf]
  %v848 = vld [vmem:[%s4 + $0x138] sm:$0xf]
  %v849 = vld [vmem:[%s4 + $0x13c] sm:$0xf]
  %v850 = vld [vmem:[%s4 + $0x140] sm:$0xf]
  %v851 = vld [vmem:[%s4 + $0x144] sm:$0xf]
  %v852 = vld [vmem:[%s4 + $0x148] sm:$0xf]
  %v853 = vld [vmem:[%s4 + $0x14c] sm:$0xf]
  %v854 = vld [vmem:[%s4 + $0x150] sm:$0xf]
  %v855 = vld [vmem:[%s4 + $0x154] sm:$0xf]
  %v856 = vld [vmem:[%s4 + $0x158] sm:$0xf]
  %v857 = vld [vmem:[%s4 + $0x15c] sm:$0xf]
  %v858 = vld [vmem:[%s4 + $0x160] sm:$0xf]
  %v859 = vld [vmem:[%s4 + $0x164] sm:$0xf]
  %v860 = vld [vmem:[%s4 + $0x168] sm:$0xf]
  %v861 = vld [vmem:[%s4 + $0x16c] sm:$0xf]
  %v862 = vld [vmem:[%s4 + $0x170] sm:$0xf]
  %v863 = vld [vmem:[%s4 + $0x174] sm:$0xf]
  %v864 = vld [vmem:[%s4 + $0x178] sm:$0xf]
  %v865 = vld [vmem:[%s4 + $0x17c] sm:$0xf]
  %v866 = vld [vmem:[%s4 + $0x180] sm:$0xf]
  %v867 = vld [vmem:[%s4 + $0x184] sm:$0xf]
  %v868 = vld [vmem:[%s4 + $0x188] sm:$0xf]
  %v869 = vld [vmem:[%s4 + $0x18c] sm:$0xf]
  %v870 = vld [vmem:[%s4 + $0x190] sm:$0xf]
  %v871 = vld [vmem:[%s4 + $0x194] sm:$0xf]
  %v872 = vld [vmem:[%s4 + $0x198] sm:$0xf]
  %v873 = vld [vmem:[%s4 + $0x19c] sm:$0xf]
  %v874 = vld [vmem:[%s4 + $0x1a0] sm:$0xf]
  %v875 = vld [vmem:[%s4 + $0x1a4] sm:$0xf]
  %v876 = vld [vmem:[%s4 + $0x1a8] sm:$0xf]
  %v877 = vld [vmem:[%s4 + $0x1ac] sm:$0xf]
  %v878 = vld [vmem:[%s4 + $0x1b0] sm:$0xf]
  %v879 = vld [vmem:[%s4 + $0x1b4] sm:$0xf]
  %v880 = vld [vmem:[%s4 + $0x1b8] sm:$0xf]
  %v881 = vld [vmem:[%s4 + $0x1bc] sm:$0xf]
  %v882 = vld [vmem:[%s4 + $0x1c0] sm:$0xf]
  %v883 = vld [vmem:[%s4 + $0x1c4] sm:$0xf]
  %v884 = vld [vmem:[%s4 + $0x1c8] sm:$0xf]
  %v885 = vld [vmem:[%s4 + $0x1cc] sm:$0xf]
  %v886 = vld [vmem:[%s4 + $0x1d0] sm:$0xf]
  %v887 = vld [vmem:[%s4 + $0x1d4] sm:$0xf]
  %v888 = vld [vmem:[%s4 + $0x1d8] sm:$0xf]
  %v889 = vld [vmem:[%s4 + $0x1dc] sm:$0xf]
  %v890 = vld [vmem:[%s4 + $0x1e0] sm:$0xf]
  %v891 = vld [vmem:[%s4 + $0x1e4] sm:$0xf]
  %v892 = vld [vmem:[%s4 + $0x1e8] sm:$0xf]
  %v893 = vld [vmem:[%s4 + $0x1ec] sm:$0xf]
  %v894 = vld [vmem:[%s4 + $0x1f0] sm:$0xf]
  %v895 = vld [vmem:[%s4 + $0x1f4] sm:$0xf]
  %v896 = vld [vmem:[%s4 + $0x1f8] sm:$0xf]
  %v897 = vld [vmem:[%s4 + $0x1fc] sm:$0xf]
  %v898 = vld [vmem:[%s5] sm:$0x1]
  %v900 = vlaneseq
  %v901 = vshrl.u32 %v900, 7
  %v902 = vsub.s32 0, %v901
  %v903 = vrot.slane %v898, %v902
  %v1033 = vunpack.c.l.b16 %v770
  %v1034 = vunpack.c.l.b16 %v771
  %v1035 = vunpack.c.l.b16 %v772
  %v1036 = vunpack.c.l.b16 %v773
  %v1037 = vunpack.c.l.b16 %v774
  %v1038 = vunpack.c.l.b16 %v775
  %v1039 = vunpack.c.l.b16 %v776
  %v1040 = vunpack.c.l.b16 %v777
  %v1041 = vunpack.c.l.b16 %v778
  %v1042 = vunpack.c.l.b16 %v779
  %v1043 = vunpack.c.l.b16 %v780
  %v1044 = vunpack.c.l.b16 %v781
  %v1045 = vunpack.c.l.b16 %v782
  %v1046 = vunpack.c.l.b16 %v783
  %v1047 = vunpack.c.l.b16 %v784
  %v1048 = vunpack.c.l.b16 %v785
  %v1049 = vunpack.c.l.b16 %v786
  %v1050 = vunpack.c.l.b16 %v787
  %v1051 = vunpack.c.l.b16 %v788
  %v1052 = vunpack.c.l.b16 %v789
  %v1053 = vunpack.c.l.b16 %v790
  %v1054 = vunpack.c.l.b16 %v791
  %v1055 = vunpack.c.l.b16 %v792
  %v1056 = vunpack.c.l.b16 %v793
  %v1057 = vunpack.c.l.b16 %v794
  %v1058 = vunpack.c.l.b16 %v795
  %v1059 = vunpack.c.l.b16 %v796
  %v1060 = vunpack.c.l.b16 %v797
  %v1061 = vunpack.c.l.b16 %v798
  %v1062 = vunpack.c.l.b16 %v799
  %v1063 = vunpack.c.l.b16 %v800
  %v1064 = vunpack.c.l.b16 %v801
  %v1065 = vunpack.c.l.b16 %v802
  %v1066 = vunpack.c.l.b16 %v803
  %v1067 = vunpack.c.l.b16 %v804
  %v1068 = vunpack.c.l.b16 %v805
  %v1069 = vunpack.c.l.b16 %v806
  %v1070 = vunpack.c.l.b16 %v807
  %v1071 = vunpack.c.l.b16 %v808
  %v1072 = vunpack.c.l.b16 %v809
  %v1073 = vunpack.c.l.b16 %v810
  %v1074 = vunpack.c.l.b16 %v811
  %v1075 = vunpack.c.l.b16 %v812
  %v1076 = vunpack.c.l.b16 %v813
  %v1077 = vunpack.c.l.b16 %v814
  %v1078 = vunpack.c.l.b16 %v815
  %v1079 = vunpack.c.l.b16 %v816
  %v1080 = vunpack.c.l.b16 %v817
  %v1081 = vunpack.c.l.b16 %v818
  %v1082 = vunpack.c.l.b16 %v819
  %v1083 = vunpack.c.l.b16 %v820
  %v1084 = vunpack.c.l.b16 %v821
  %v1085 = vunpack.c.l.b16 %v822
  %v1086 = vunpack.c.l.b16 %v823
  %v1087 = vunpack.c.l.b16 %v824
  %v1088 = vunpack.c.l.b16 %v825
  %v1089 = vunpack.c.l.b16 %v826
  %v1090 = vunpack.c.l.b16 %v827
  %v1091 = vunpack.c.l.b16 %v828
  %v1092 = vunpack.c.l.b16 %v829
  %v1093 = vunpack.c.l.b16 %v830
  %v1094 = vunpack.c.l.b16 %v831
  %v1095 = vunpack.c.l.b16 %v832
  %v1096 = vunpack.c.l.b16 %v833
  %v1097 = vunpack.c.l.b16 %v834
  %v1098 = vunpack.c.l.b16 %v835
  %v1099 = vunpack.c.l.b16 %v836
  %v1100 = vunpack.c.l.b16 %v837
  %v1101 = vunpack.c.l.b16 %v838
  %v1102 = vunpack.c.l.b16 %v839
  %v1103 = vunpack.c.l.b16 %v840
  %v1104 = vunpack.c.l.b16 %v841
  %v1105 = vunpack.c.l.b16 %v842
  %v1106 = vunpack.c.l.b16 %v843
  %v1107 = vunpack.c.l.b16 %v844
  %v1108 = vunpack.c.l.b16 %v845
  %v1109 = vunpack.c.l.b16 %v846
  %v1110 = vunpack.c.l.b16 %v847
  %v1111 = vunpack.c.l.b16 %v848
  %v1112 = vunpack.c.l.b16 %v849
  %v1113 = vunpack.c.l.b16 %v850
  %v1114 = vunpack.c.l.b16 %v851
  %v1115 = vunpack.c.l.b16 %v852
  %v1116 = vunpack.c.l.b16 %v853
  %v1117 = vunpack.c.l.b16 %v854
  %v1118 = vunpack.c.l.b16 %v855
  %v1119 = vunpack.c.l.b16 %v856
  %v1120 = vunpack.c.l.b16 %v857
  %v1121 = vunpack.c.l.b16 %v858
  %v1122 = vunpack.c.l.b16 %v859
  %v1123 = vunpack.c.l.b16 %v860
  %v1124 = vunpack.c.l.b16 %v861
  %v1125 = vunpack.c.l.b16 %v862
  %v1126 = vunpack.c.l.b16 %v863
  %v1127 = vunpack.c.l.b16 %v864
  %v1128 = vunpack.c.l.b16 %v865
  %v1129 = vunpack.c.l.b16 %v866
  %v1130 = vunpack.c.l.b16 %v867
  %v1131 = vunpack.c.l.b16 %v868
  %v1132 = vunpack.c.l.b16 %v869
  %v1133 = vunpack.c.l.b16 %v870
  %v1134 = vunpack.c.l.b16 %v871
  %v1135 = vunpack.c.l.b16 %v872
  %v1136 = vunpack.c.l.b16 %v873
  %v1137 = vunpack.c.l.b16 %v874
  %v1138 = vunpack.c.l.b16 %v875
  %v1139 = vunpack.c.l.b16 %v876
  %v1140 = vunpack.c.l.b16 %v877
  %v1141 = vunpack.c.l.b16 %v878
  %v1142 = vunpack.c.l.b16 %v879
  %v1143 = vunpack.c.l.b16 %v880
  %v1144 = vunpack.c.l.b16 %v881
  %v1145 = vunpack.c.l.b16 %v882
  %v1146 = vunpack.c.l.b16 %v883
  %v1147 = vunpack.c.l.b16 %v884
  %v1148 = vunpack.c.l.b16 %v885
  %v1149 = vunpack.c.l.b16 %v886
  %v1150 = vunpack.c.l.b16 %v887
  %v1151 = vunpack.c.l.b16 %v888
  %v1152 = vunpack.c.l.b16 %v889
  %v1153 = vunpack.c.l.b16 %v890
  %v1154 = vunpack.c.l.b16 %v891
  %v1155 = vunpack.c.l.b16 %v892
  %v1156 = vunpack.c.l.b16 %v893
  %v1157 = vunpack.c.l.b16 %v894
  %v1158 = vunpack.c.l.b16 %v895
  %v1159 = vunpack.c.l.b16 %v896
  %v1160 = vunpack.c.l.b16 %v897
  %v1161 = vpack.c.b16 %v1034, %v1033
  %v1162 = vpack.c.b16 %v1036, %v1035
  %v1163 = vpack.c.b16 %v1038, %v1037
  %v1164 = vpack.c.b16 %v1040, %v1039
  %v1165 = vpack.c.b16 %v1042, %v1041
  %v1166 = vpack.c.b16 %v1044, %v1043
  %v1167 = vpack.c.b16 %v1046, %v1045
  %v1168 = vpack.c.b16 %v1048, %v1047
  %v1169 = vpack.c.b16 %v1050, %v1049
  %v1170 = vpack.c.b16 %v1052, %v1051
  %v1171 = vpack.c.b16 %v1054, %v1053
  %v1172 = vpack.c.b16 %v1056, %v1055
  %v1173 = vpack.c.b16 %v1058, %v1057
  %v1174 = vpack.c.b16 %v1060, %v1059
  %v1175 = vpack.c.b16 %v1062, %v1061
  %v1176 = vpack.c.b16 %v1064, %v1063
  %v1177 = vpack.c.b16 %v1066, %v1065
  %v1178 = vpack.c.b16 %v1068, %v1067
  %v1179 = vpack.c.b16 %v1070, %v1069
  %v1180 = vpack.c.b16 %v1072, %v1071
  %v1181 = vpack.c.b16 %v1074, %v1073
  %v1182 = vpack.c.b16 %v1076, %v1075
  %v1183 = vpack.c.b16 %v1078, %v1077
  %v1184 = vpack.c.b16 %v1080, %v1079
  %v1185 = vpack.c.b16 %v1082, %v1081
  %v1186 = vpack.c.b16 %v1084, %v1083
  %v1187 = vpack.c.b16 %v1086, %v1085
  %v1188 = vpack.c.b16 %v1088, %v1087
  %v1189 = vpack.c.b16 %v1090, %v1089
  %v1190 = vpack.c.b16 %v1092, %v1091
  %v1191 = vpack.c.b16 %v1094, %v1093
  %v1192 = vpack.c.b16 %v1096, %v1095
  %v1193 = vpack.c.b16 %v1098, %v1097
  %v1194 = vpack.c.b16 %v1100, %v1099
  %v1195 = vpack.c.b16 %v1102, %v1101
  %v1196 = vpack.c.b16 %v1104, %v1103
  %v1197 = vpack.c.b16 %v1106, %v1105
  %v1198 = vpack.c.b16 %v1108, %v1107
  %v1199 = vpack.c.b16 %v1110, %v1109
  %v1200 = vpack.c.b16 %v1112, %v1111
  %v1201 = vpack.c.b16 %v1114, %v1113
  %v1202 = vpack.c.b16 %v1116, %v1115
  %v1203 = vpack.c.b16 %v1118, %v1117
  %v1204 = vpack.c.b16 %v1120, %v1119
  %v1205 = vpack.c.b16 %v1122, %v1121
  %v1206 = vpack.c.b16 %v1124, %v1123
  %v1207 = vpack.c.b16 %v1126, %v1125
  %v1208 = vpack.c.b16 %v1128, %v1127
  %v1209 = vpack.c.b16 %v1130, %v1129
  %v1210 = vpack.c.b16 %v1132, %v1131
  %v1211 = vpack.c.b16 %v1134, %v1133
  %v1212 = vpack.c.b16 %v1136, %v1135
  %v1213 = vpack.c.b16 %v1138, %v1137
  %v1214 = vpack.c.b16 %v1140, %v1139
  %v1215 = vpack.c.b16 %v1142, %v1141
  %v1216 = vpack.c.b16 %v1144, %v1143
  %v1217 = vpack.c.b16 %v1146, %v1145
  %v1218 = vpack.c.b16 %v1148, %v1147
  %v1219 = vpack.c.b16 %v1150, %v1149
  %v1220 = vpack.c.b16 %v1152, %v1151
  %v1221 = vpack.c.b16 %v1154, %v1153
  %v1222 = vpack.c.b16 %v1156, %v1155
  %v1223 = vpack.c.b16 %v1158, %v1157
  %v1224 = vpack.c.b16 %v1160, %v1159
  %1289 = vmatprep.subr.bf16.mxu0 0
  %1290 = vmatpush1.bf16.msra.mxu0 %v1168
  %1291 = vmatprep.subr.bf16.mxu0 0
  %1292 = vmatpush1.bf16.msra.mxu0 %v1167
  %1293 = vmatprep.subr.bf16.mxu0 0
  %1294 = vmatpush1.bf16.msra.mxu0 %v1166
  %1295 = vmatprep.subr.bf16.mxu0 0
  %1296 = vmatpush1.bf16.msra.mxu0 %v1165
  %1297 = vmatprep.subr.bf16.mxu0 0
  %1298 = vmatpush1.bf16.msra.mxu0 %v1164
  %1299 = vmatprep.subr.bf16.mxu0 0
  %1300 = vmatpush1.bf16.msra.mxu0 %v1163
  %1301 = vmatprep.subr.bf16.mxu0 0
  %1302 = vmatpush1.bf16.msra.mxu0 %v1162
  %1303 = vmatprep.subr.bf16.mxu0 0
  %1304 = vmatpush1.bf16.msra.mxu0 %v1161
  %1305 = vmatprep.subr.bf16.mxu0 0
  %1306 = vmatpush2.bf16.msra.mxu0 %v1176
  %1307 = vmatprep.subr.bf16.mxu0 0
  %1308 = vmatpush2.bf16.msra.mxu0 %v1175
  %1309 = vmatprep.subr.bf16.mxu0 0
  %1310 = vmatpush2.bf16.msra.mxu0 %v1174
  %1311 = vmatprep.subr.bf16.mxu0 0
  %1312 = vmatpush2.bf16.msra.mxu0 %v1173
  %1313 = vmatprep.subr.bf16.mxu0 0
  %1314 = vmatpush2.bf16.msra.mxu0 %v1172
  %1315 = vmatprep.subr.bf16.mxu0 0
  %1316 = vmatpush2.bf16.msra.mxu0 %v1171
  %1317 = vmatprep.subr.bf16.mxu0 0
  %1318 = vmatpush2.bf16.msra.mxu0 %v1170
  %1319 = vmatprep.subr.bf16.mxu0 0
  %1320 = vmatpush2.bf16.msra.mxu0 %v1169
  %1321 = vmatprep.mubr.bf16.mxu0 %v763
  %1322 = vmatmul.mubr.bf16.gmra.mxu0 %v762
  %v1323 = vpop.f32.mrf.mxu0
  %v1324 = vadd.f32 %v903, %v1323
  %v1325 = vpop.f32.mrf.mxu0
  %v1326 = vpop.f32.mrf.mxu0
  %v1327 = vadd.f32 %v903, %v1326
  %v1328 = vpop.f32.mrf.mxu0
  %1329 = vdwg.mxu0
  %1330 = vmatprep.subr.bf16.mxu0 0
  %1331 = vmatpush1.bf16.msra.mxu0 %v1184
  %1332 = vmatprep.subr.bf16.mxu0 0
  %1333 = vmatpush1.bf16.msra.mxu0 %v1183
  %1334 = vmatprep.subr.bf16.mxu0 0
  %1335 = vmatpush1.bf16.msra.mxu0 %v1182
  %1336 = vmatprep.subr.bf16.mxu0 0
  %1337 = vmatpush1.bf16.msra.mxu0 %v1181
  %1338 = vmatprep.subr.bf16.mxu0 0
  %1339 = vmatpush1.bf16.msra.mxu0 %v1180
  %1340 = vmatprep.subr.bf16.mxu0 0
  %1341 = vmatpush1.bf16.msra.mxu0 %v1179
  %1342 = vmatprep.subr.bf16.mxu0 0
  %1343 = vmatpush1.bf16.msra.mxu0 %v1178
  %1344 = vmatprep.subr.bf16.mxu0 0
  %1345 = vmatpush1.bf16.msra.mxu0 %v1177
  %1346 = vmatprep.subr.bf16.mxu0 0
  %1347 = vmatpush2.bf16.msra.mxu0 %v1192
  %1348 = vmatprep.subr.bf16.mxu0 0
  %1349 = vmatpush2.bf16.msra.mxu0 %v1191
  %1350 = vmatprep.subr.bf16.mxu0 0
  %1351 = vmatpush2.bf16.msra.mxu0 %v1190
  %1352 = vmatprep.subr.bf16.mxu0 0
  %1353 = vmatpush2.bf16.msra.mxu0 %v1189
  %1354 = vmatprep.subr.bf16.mxu0 0
  %1355 = vmatpush2.bf16.msra.mxu0 %v1188
  %1356 = vmatprep.subr.bf16.mxu0 0
  %1357 = vmatpush2.bf16.msra.mxu0 %v1187
  %1358 = vmatprep.subr.bf16.mxu0 0
  %1359 = vmatpush2.bf16.msra.mxu0 %v1186
  %1360 = vmatprep.subr.bf16.mxu0 0
  %1361 = vmatpush2.bf16.msra.mxu0 %v1185
  %1362 = vmatprep.mubr.bf16.mxu0 %v765
  %1363 = vmatmul.mubr.bf16.gmra.mxu0 %v764
  %v1364 = vpop.f32.mrf.mxu0
  %v1365 = vadd.f32 %v1324, %v1364
  %v1366 = vpop.f32.mrf.mxu0
  %v1367 = vpop.f32.mrf.mxu0
  %v1368 = vadd.f32 %v1327, %v1367
  %v1369 = vpop.f32.mrf.mxu0
  %1370 = vdwg.mxu0
  %1371 = vmatprep.subr.bf16.mxu0 0
  %1372 = vmatpush1.bf16.msra.mxu0 %v1200
  %1373 = vmatprep.subr.bf16.mxu0 0
  %1374 = vmatpush1.bf16.msra.mxu0 %v1199
  %1375 = vmatprep.subr.bf16.mxu0 0
  %1376 = vmatpush1.bf16.msra.mxu0 %v1198
  %1377 = vmatprep.subr.bf16.mxu0 0
  %1378 = vmatpush1.bf16.msra.mxu0 %v1197
  %1379 = vmatprep.subr.bf16.mxu0 0
  %1380 = vmatpush1.bf16.msra.mxu0 %v1196
  %1381 = vmatprep.subr.bf16.mxu0 0
  %1382 = vmatpush1.bf16.msra.mxu0 %v1195
  %1383 = vmatprep.subr.bf16.mxu0 0
  %1384 = vmatpush1.bf16.msra.mxu0 %v1194
  %1385 = vmatprep.subr.bf16.mxu0 0
  %1386 = vmatpush1.bf16.msra.mxu0 %v1193
  %1387 = vmatprep.subr.bf16.mxu0 0
  %1388 = vmatpush2.bf16.msra.mxu0 %v1208
  %1389 = vmatprep.subr.bf16.mxu0 0
  %1390 = vmatpush2.bf16.msra.mxu0 %v1207
  %1391 = vmatprep.subr.bf16.mxu0 0
  %1392 = vmatpush2.bf16.msra.mxu0 %v1206
  %1393 = vmatprep.subr.bf16.mxu0 0
  %1394 = vmatpush2.bf16.msra.mxu0 %v1205
  %1395 = vmatprep.subr.bf16.mxu0 0
  %1396 = vmatpush2.bf16.msra.mxu0 %v1204
  %1397 = vmatprep.subr.bf16.mxu0 0
  %1398 = vmatpush2.bf16.msra.mxu0 %v1203
  %1399 = vmatprep.subr.bf16.mxu0 0
  %1400 = vmatpush2.bf16.msra.mxu0 %v1202
  %1401 = vmatprep.subr.bf16.mxu0 0
  %1402 = vmatpush2.bf16.msra.mxu0 %v1201
  %1403 = vmatprep.mubr.bf16.mxu0 %v767
  %1404 = vmatmul.mubr.bf16.gmra.mxu0 %v766
  %v1405 = vpop.f32.mrf.mxu0
  %v1406 = vadd.f32 %v1365, %v1405
  %v1407 = vpop.f32.mrf.mxu0
  %v1408 = vpop.f32.mrf.mxu0
  %v1409 = vadd.f32 %v1368, %v1408
  %v1410 = vpop.f32.mrf.mxu0
  %1411 = vdwg.mxu0
  %1412 = vmatprep.subr.bf16.mxu0 0
  %1413 = vmatpush1.bf16.msra.mxu0 %v1216
  %1414 = vmatprep.subr.bf16.mxu0 0
  %1415 = vmatpush1.bf16.msra.mxu0 %v1215
  %1416 = vmatprep.subr.bf16.mxu0 0
  %1417 = vmatpush1.bf16.msra.mxu0 %v1214
  %1418 = vmatprep.subr.bf16.mxu0 0
  %1419 = vmatpush1.bf16.msra.mxu0 %v1213
  %1420 = vmatprep.subr.bf16.mxu0 0
  %1421 = vmatpush1.bf16.msra.mxu0 %v1212
  %1422 = vmatprep.subr.bf16.mxu0 0
  %1423 = vmatpush1.bf16.msra.mxu0 %v1211
  %1424 = vmatprep.subr.bf16.mxu0 0
  %1425 = vmatpush1.bf16.msra.mxu0 %v1210
  %1426 = vmatprep.subr.bf16.mxu0 0
  %1427 = vmatpush1.bf16.msra.mxu0 %v1209
  %1428 = vmatprep.subr.bf16.mxu0 0
  %1429 = vmatpush2.bf16.msra.mxu0 %v1224
  %1430 = vmatprep.subr.bf16.mxu0 0
  %1431 = vmatpush2.bf16.msra.mxu0 %v1223
  %1432 = vmatprep.subr.bf16.mxu0 0
  %1433 = vmatpush2.bf16.msra.mxu0 %v1222
  %1434 = vmatprep.subr.bf16.mxu0 0
  %1435 = vmatpush2.bf16.msra.mxu0 %v1221
  %1436 = vmatprep.subr.bf16.mxu0 0
  %1437 = vmatpush2.bf16.msra.mxu0 %v1220
  %1438 = vmatprep.subr.bf16.mxu0 0
  %1439 = vmatpush2.bf16.msra.mxu0 %v1219
  %1440 = vmatprep.subr.bf16.mxu0 0
  %1441 = vmatpush2.bf16.msra.mxu0 %v1218
  %1442 = vmatprep.subr.bf16.mxu0 0
  %1443 = vmatpush2.bf16.msra.mxu0 %v1217
  %1444 = vmatprep.mubr.bf16.mxu0 %v769
  %1445 = vmatmul.mubr.bf16.gmra.mxu0 %v768
  %v1446 = vpop.f32.mrf.mxu0
  %v1447 = vadd.f32 %v1406, %v1446
  %v1448 = vpop.f32.mrf.mxu0
  %v1449 = vpop.f32.mrf.mxu0
  %v1450 = vadd.f32 %v1409, %v1449
  %v1451 = vpop.f32.mrf.mxu0
  %1452 = vdwg.mxu0
  %v1453 = vmul.f32 %v1447, %v1447
  %v1454 = vmul.f32 %v1450, %v1450
  %1455 = vadd.xlane.f32.xlu0 %v1453
  %v1456 = vpop.xlane.xlu0 %1455
  %1457 = vadd.xlane.f32.xlu0 %v1454
  %v1458 = vpop.xlane.xlu0 %1457
  %v1459 = vmax.f32 %v1456, 1e-24
  %v1460 = vmax.f32 %v1458, 1e-24
  %v1461 = vrsqrt.pop %v1459
  %v1462 = vrsqrt.pop %v1460
  %v1463 = vmul.f32 %v1447, %v1461
  %v1464 = vmul.f32 %v1450, %v1462
  %v1465 = vmul.f32 %v744, %v1463
  %v1466 = vmul.f32 %v745, %v1464
  %1467 = vadd.xlane.f32.xlu0 %v1465
  %v1468 = vpop.xlane.xlu0 %1467
  %1469 = vadd.xlane.f32.xlu0 %v1466
  %v1470 = vpop.xlane.xlu0 %1469
  %1471 = vst [vmem:[%s8] sm:$0xff] %v1468
  %1472 = vst [vmem:[%s8 + $0x8] sm:$0xff] %v1470
  %v1473 = vpack.c.bf16 %v745, %v744
  %v1475 = vunpack.c.l.b16 %v1473
  %v1476 = vunpack.c.h.b16 %v1473
  %v1477 = vpack.c.b16 %v1475, %v1475
  %v1478 = vpack.c.b16 %v1476, %v1476
  %1481 = vst [vmem:[%s6] sm:$0xf] %v1477
  %1482 = vst [vmem:[%s6 + $0x4] sm:$0xf] %v1478
  %v1483 = vpack.c.bf16 %v1464, %v1463
  %v1485 = vunpack.c.l.b16 %v1483
  %v1486 = vunpack.c.h.b16 %v1483
  %v1487 = vpack.c.b16 %v1485, %v1485
  %v1488 = vpack.c.b16 %v1486, %v1486
  %1491 = vst [vmem:[%s7] sm:$0xf] %v1487
  %1492 = vst [vmem:[%s7 + $0x4] sm:$0xf] %v1488
  // Predicated region
  $region26: #{moco_forward.5} parent=0 // pred_check
    _
  $region27: #{moco_forward.5} parent=0 // pred_check_branch
    %1494 = sbr.rel (0) target = $region29
  $region28: #{moco_forward.5} parent=0 // pred_region
    _
  $region29: #{moco_forward.5} parent=0 // pred_fallthru
    _
  // Predicated region
  $region30: #{moco_forward.5} parent=0 // pred_check
    _
  $region31: #{moco_forward.5} parent=0 // pred_check_branch
    %1496 = sbr.rel (0) target = $region33
  $region32: #{moco_forward.5} parent=0 // pred_region
    _
  $region33: #{moco_forward.5} parent=0 // pred_fallthru
    _
  // Predicated region
  $region34: #{moco_forward.5} parent=0 // pred_check
    _
  $region35: #{moco_forward.5} parent=0 // pred_check_branch
    %1498 = sbr.rel (0) target = $region37
  $region36: #{moco_forward.5} parent=0 // pred_region
    _
  $region37: #{moco_forward.5} parent=0 // pred_fallthru
    _
  // Predicated region
  $region38: #{moco_forward.5} parent=0 // pred_check
    _
  $region39: #{moco_forward.5} parent=0 // pred_check_branch
    %1500 = sbr.rel (0) target = $region41
  $region40: #{moco_forward.5} parent=0 // pred_region
    _
  $region41: #{moco_forward.5} parent=0 // pred_fallthru
    _
  // Predicated region
  $region42: #{moco_forward.5} parent=0 // pred_check
    _
  $region43: #{moco_forward.5} parent=0 // pred_check_branch
    %1502 = sbr.rel (0) target = $region45
  $region44: #{moco_forward.5} parent=0 // pred_region
    _
  $region45: #{moco_forward.5} parent=0 // pred_fallthru
    _
  // Predicated region
  $region46: #{moco_forward.5} parent=0 // pred_check
    _
  $region47: #{moco_forward.5} parent=0 // pred_check_branch
    %1504 = sbr.rel (0) target = $region49
  $region48: #{moco_forward.5} parent=0 // pred_region
    _
  $region49: #{moco_forward.5} parent=0 // pred_fallthru
    _

// kernel: moco_forward.6
$region0: #{moco_forward.6}
  #allocation0 [shape = 'u32[]', space=smem, size = 0x4, offset = 0x4, fixed_abs, tag = 'smem constant byte address 0x4 - core index']
  #allocation1 [shape = 'u32[144,128]{1,0:T(1,128)}', space=vmem, size = 0x12000, scoped, tag = 'internal scratch']
  %s0 = inlined_call_operand.vmem [shape: bf16[16,128], index: 0, kind: input, shape index: {}]
  %s1 = inlined_call_operand.vmem [shape: bf16[512,128], index: 1, kind: input, shape index: {}]
  %s2 = inlined_call_operand.vmem [shape: f32[16,512], index: 2, kind: output, shape index: {}]
  %s3 = sld [smem:[#allocation0]]
  $region60: #{moco_forward.6} parent=0
    _
  %s5 = ssub.s32 1, %s3
  %s6 = scalar_select 0, %s5, %s3
  $region1: #{moco_forward.6} parent=0
    #allocation2 [shape = 'u8[32768]{0}', space=vmem, size = 0x8000, scoped, tag = 'output window, operand 0']
    loop: start=0, step=1, limit=4
    $region2: #{moco_forward.6} parent=1 // loop_pre_header
      _
    $region3: #{moco_forward.6} parent=1 // loop_header
      %s8 = sphi 0, %s12
      %p9 = scmp.ge.s32.totalorder %s8, 4
      %s16 = sphi 0, %s16
      %s18 = sphi 0, %s16
      %s19 = sphi 0, %s18
      %s33 = sphi 0, %s19
      %s39 = sphi 0, %s41
      %s42 = sphi 0, %s39
      %s43 = sphi 0, %s42
      %s59 = sphi 0, %s43
      %s65 = sphi 0, %s67
      %s68 = sphi 0, %s65
      %s69 = sphi 0, %s68
      %s85 = sphi 0, %s69
    $region4: #{moco_forward.6} parent=1 // loop_header_branch
      %11 = sbr.rel (%p9) target = $region8
    $region5: #{moco_forward.6} parent=1 // loop_body
      %s13 = ssub.s32 %s8, 1
      %s14 = ssub.s32 %s8, 2
      %s15 = sadd.s32 %s8, 1
      %s17 = sadd.s32 %s16, 1
      %p20 = scmp.eq.s32.totalorder %s8, 1
      %p21 = scmp.ne.s32.totalorder %s16, %s18
      %p22 = scmp.eq.s32.totalorder %s8, 0
      %p23 = por %p21, %p22
      %p24 = scmp.ne.s32.totalorder %s16, %s18
      %p25 = scmp.eq.s32.totalorder %s13, 1
      %p26 = por %p24, %p25
      %p27 = scmp.ne.s32.totalorder %s18, %s19
      %p28 = scmp.eq.s32.totalorder %s13, 0
      %p29 = por %p27, %p28
      %p30 = scmp.ne.s32.totalorder %s18, %s19
      %p31 = scmp.eq.s32.totalorder %s14, 1
      %p32 = por %p30, %p31
      %p34 = scmp.ne.s32.totalorder %s19, %s33
      %p35 = scmp.eq.s32.totalorder %s14, 0
      %p36 = por %p34, %p35
      %s37 = ssub.s32 %s8, %s15
      %p38 = scmp.eq.s32.totalorder %s37, 0
      %s40 = sadd.s32 %s39, 1
      %s41 = scalar_select %p38, %s39, %s40
      %p44 = pneg %p38
      %p45 = scmp.eq.s32.totalorder %s8, 1
      %p46 = por %p44, %p45
      %p47 = scmp.ne.s32.totalorder %s39, %s42
      %p48 = scmp.eq.s32.totalorder %s8, 0
      %p49 = por %p47, %p48
      %p50 = scmp.ne.s32.totalorder %s39, %s42
      %p51 = scmp.eq.s32.totalorder %s13, 1
      %p52 = por %p50, %p51
      %p53 = scmp.ne.s32.totalorder %s42, %s43
      %p54 = scmp.eq.s32.totalorder %s13, 0
      %p55 = por %p53, %p54
      %p56 = scmp.ne.s32.totalorder %s42, %s43
      %p57 = scmp.eq.s32.totalorder %s14, 1
      %p58 = por %p56, %p57
      %p60 = scmp.ne.s32.totalorder %s43, %s59
      %p61 = scmp.eq.s32.totalorder %s14, 0
      %p62 = por %p60, %p61
      %s63 = ssub.s32 %s8, %s15
      %p64 = scmp.eq.s32.totalorder %s63, 0
      %s66 = sadd.s32 %s65, 1
      %s67 = scalar_select %p64, %s65, %s66
      %p70 = pneg %p64
      %p71 = scmp.eq.s32.totalorder %s8, 1
      %p72 = por %p70, %p71
      %p73 = scmp.ne.s32.totalorder %s65, %s68
      %p74 = scmp.eq.s32.totalorder %s8, 0
      %p75 = por %p73, %p74
      %p76 = scmp.ne.s32.totalorder %s65, %s68
      %p77 = scmp.eq.s32.totalorder %s13, 1
      %p78 = por %p76, %p77
      %p79 = scmp.ne.s32.totalorder %s68, %s69
      %p80 = scmp.eq.s32.totalorder %s13, 0
      %p81 = por %p79, %p80
      %p82 = scmp.ne.s32.totalorder %s68, %s69
      %p83 = scmp.eq.s32.totalorder %s14, 1
      %p84 = por %p82, %p83
      %p86 = scmp.ne.s32.totalorder %s69, %s85
      %p87 = scmp.eq.s32.totalorder %s14, 0
      %p88 = por %p86, %p87
      %p89 = scmp.le.s32.totalorder 1, %s8
      %p90 = scmp.lt.s32.totalorder %s8, 3
      %p91 = pnand %p89, %p90
      %p92 = pneg %p91
      // Predicated region
      $region9: #{moco_forward.6} parent=5 // pred_check
        _
      $region10: #{moco_forward.6} parent=5 // pred_check_branch
        %94 = sbr.rel (%p91) target = $region12
      $region11: #{moco_forward.6} parent=5 // pred_region
        %s95 = ssub.s32 %s8, 1
        // Predicated region
        $region13: #{moco_forward.6} parent=11 // pred_check
          %p96 = pneg %p29
        $region14: #{moco_forward.6} parent=11 // pred_check_branch
          %98 = sbr.rel (%p96) target = $region16
        $region15: #{moco_forward.6} parent=11 // pred_region
          _
        $region16: #{moco_forward.6} parent=11 // pred_fallthru
          _
      $region12: #{moco_forward.6} parent=5 // pred_fallthru
        _
      %p99 = scmp.lt.s32.totalorder %s8, 2
      // Predicated region
      $region17: #{moco_forward.6} parent=5 // pred_check
        %p100 = pneg %p99
      $region18: #{moco_forward.6} parent=5 // pred_check_branch
        %102 = sbr.rel (%p100) target = $region20
      $region19: #{moco_forward.6} parent=5 // pred_region
        // Predicated region
        $region21: #{moco_forward.6} parent=19 // pred_check
          %p103 = pneg %p49
        $region22: #{moco_forward.6} parent=19 // pred_check_branch
          %105 = sbr.rel (%p103) target = $region24
        $region23: #{moco_forward.6} parent=19 // pred_region
          %s106 = smul.u32 32, %s8
          %p107 = scmp.lt.s32.totalorder %s106, 63
          %s108 = scalar_select %p107, %s106, 63
          %s109 = smul.addr %s108, 4
          %s110 = scalar_lea.vmem %s1, %s109
          %s111 = smul.u32 32, %s8
        $region24: #{moco_forward.6} parent=19 // pred_fallthru
          _
      $region20: #{moco_forward.6} parent=5 // pred_fallthru
        _
      %p112 = scmp.le.s32.totalorder 1, %s8
      %p113 = scmp.lt.s32.totalorder %s8, 3
      %p114 = pnand %p112, %p113
      %p115 = pneg %p114
      // Predicated region
      $region25: #{moco_forward.6} parent=5 // pred_check
        _
      $region26: #{moco_forward.6} parent=5 // pred_check_branch
        %117 = sbr.rel (%p114) target = $region28
      $region27: #{moco_forward.6} parent=5 // pred_region
        %s118 = ssub.s32 %s8, 1
        %p119 = pneg %p29
        %p120 = pneg %p26
        %s121 = smul.u32 32, %s13
        %p122 = scmp.lt.s32.totalorder %s121, 63
        %s123 = scalar_select %p122, %s121, 63
        %s124 = smul.addr %s123, 4
        %s125 = scalar_lea.vmem %s1, %s124
        %p126 = pneg %p55
        %p127 = pneg %p52
        %p128 = pneg %p81
        %p129 = pneg %p78
        %s130 = sand.u32 %s68, 1
        %s131 = sand.u32 %s68, 1
        %s132 = smul.addr %s131, 32
        %s133 = scalar_lea.vmem [#allocation2], %s132
        %s134 = smul.u32 32, %s13
        %p135 = scmp.lt.s32.totalorder %s134, 63
        %s136 = scalar_select %p135, %s134, 63
        %s137 = smul.addr %s136, 4
        %s138 = scalar_lea.vmem %s1, %s137
        %s139 = smul.u32 32, %s13
        %s140 = smul.u32 2, %s13
        %v142 = vld [vmem:[%s0] sm:$0xf]
        %v143 = vld [vmem:[%s0 + $0x4] sm:$0xf]
        %v144 = vld [vmem:[%s138] sm:$0xf]
        %v145 = vld [vmem:[%s138 + $0x4] sm:$0xf]
        %v146 = vld [vmem:[%s138 + $0x8] sm:$0xf]
        %v147 = vld [vmem:[%s138 + $0xc] sm:$0xf]
        %v148 = vld [vmem:[%s138 + $0x10] sm:$0xf]
        %v149 = vld [vmem:[%s138 + $0x14] sm:$0xf]
        %v150 = vld [vmem:[%s138 + $0x18] sm:$0xf]
        %v151 = vld [vmem:[%s138 + $0x1c] sm:$0xf]
        %v152 = vld [vmem:[%s138 + $0x20] sm:$0xf]
        %v153 = vld [vmem:[%s138 + $0x24] sm:$0xf]
        %v154 = vld [vmem:[%s138 + $0x28] sm:$0xf]
        %v155 = vld [vmem:[%s138 + $0x2c] sm:$0xf]
        %v156 = vld [vmem:[%s138 + $0x30] sm:$0xf]
        %v157 = vld [vmem:[%s138 + $0x34] sm:$0xf]
        %v158 = vld [vmem:[%s138 + $0x38] sm:$0xf]
        %v159 = vld [vmem:[%s138 + $0x3c] sm:$0xf]
        %v160 = vld [vmem:[%s138 + $0x40] sm:$0xf]
        %v161 = vld [vmem:[%s138 + $0x44] sm:$0xf]
        %v162 = vld [vmem:[%s138 + $0x48] sm:$0xf]
        %v163 = vld [vmem:[%s138 + $0x4c] sm:$0xf]
        %v164 = vld [vmem:[%s138 + $0x50] sm:$0xf]
        %v165 = vld [vmem:[%s138 + $0x54] sm:$0xf]
        %v166 = vld [vmem:[%s138 + $0x58] sm:$0xf]
        %v167 = vld [vmem:[%s138 + $0x5c] sm:$0xf]
        %v168 = vld [vmem:[%s138 + $0x60] sm:$0xf]
        %v169 = vld [vmem:[%s138 + $0x64] sm:$0xf]
        %v170 = vld [vmem:[%s138 + $0x68] sm:$0xf]
        %v171 = vld [vmem:[%s138 + $0x6c] sm:$0xf]
        %v172 = vld [vmem:[%s138 + $0x70] sm:$0xf]
        %v173 = vld [vmem:[%s138 + $0x74] sm:$0xf]
        %v174 = vld [vmem:[%s138 + $0x78] sm:$0xf]
        %v175 = vld [vmem:[%s138 + $0x7c] sm:$0xf]
        %v178 = vunpack.c.l.b16 %v142
        %v179 = vunpack.c.l.b16 %v143
        %v180 = vpack.c.b16 %v179, %v178
        %v214 = vunpack.c.l.b16 %v144
        %v215 = vunpack.c.l.b16 %v145
        %v216 = vunpack.c.l.b16 %v146
        %v217 = vunpack.c.l.b16 %v147
        %v218 = vunpack.c.l.b16 %v148
        %v219 = vunpack.c.l.b16 %v149
        %v220 = vunpack.c.l.b16 %v150
        %v221 = vunpack.c.l.b16 %v151
        %v222 = vunpack.c.l.b16 %v152
        %v223 = vunpack.c.l.b16 %v153
        %v224 = vunpack.c.l.b16 %v154
        %v225 = vunpack.c.l.b16 %v155
        %v226 = vunpack.c.l.b16 %v156
        %v227 = vunpack.c.l.b16 %v157
        %v228 = vunpack.c.l.b16 %v158
        %v229 = vunpack.c.l.b16 %v159
        %v230 = vunpack.c.l.b16 %v160
        %v231 = vunpack.c.l.b16 %v161
        %v232 = vunpack.c.l.b16 %v162
        %v233 = vunpack.c.l.b16 %v163
        %v234 = vunpack.c.l.b16 %v164
        %v235 = vunpack.c.l.b16 %v165
        %v236 = vunpack.c.l.b16 %v166
        %v237 = vunpack.c.l.b16 %v167
        %v238 = vunpack.c.l.b16 %v168
        %v239 = vunpack.c.l.b16 %v169
        %v240 = vunpack.c.l.b16 %v170
        %v241 = vunpack.c.l.b16 %v171
        %v242 = vunpack.c.l.b16 %v172
        %v243 = vunpack.c.l.b16 %v173
        %v244 = vunpack.c.l.b16 %v174
        %v245 = vunpack.c.l.b16 %v175
        %v246 = vpack.c.b16 %v215, %v214
        %v247 = vpack.c.b16 %v217, %v216
        %v248 = vpack.c.b16 %v219, %v218
        %v249 = vpack.c.b16 %v221, %v220
        %v250 = vpack.c.b16 %v223, %v222
        %v251 = vpack.c.b16 %v225, %v224
        %v252 = vpack.c.b16 %v227, %v226
        %v253 = vpack.c.b16 %v229, %v228
        %v254 = vpack.c.b16 %v231, %v230
        %v255 = vpack.c.b16 %v233, %v232
        %v256 = vpack.c.b16 %v235, %v234
        %v257 = vpack.c.b16 %v237, %v236
        %v258 = vpack.c.b16 %v239, %v238
        %v259 = vpack.c.b16 %v241, %v240
        %v260 = vpack.c.b16 %v243, %v242
        %v261 = vpack.c.b16 %v245, %v244
        %278 = vmatprep.subr.bf16.mxu0 0
        %279 = vmatpush1.bf16.xpose.msra.mxu0 %v253
        %280 = vmatprep.subr.bf16.mxu0 0
        %281 = vmatpush1.bf16.xpose.msra.mxu0 %v252
        %282 = vmatprep.subr.bf16.mxu0 0
        %283 = vmatpush1.bf16.xpose.msra.mxu0 %v251
        %284 = vmatprep.subr.bf16.mxu0 0
        %285 = vmatpush1.bf16.xpose.msra.mxu0 %v250
        %286 = vmatprep.subr.bf16.mxu0 0
        %287 = vmatpush1.bf16.xpose.msra.mxu0 %v249
        %288 = vmatprep.subr.bf16.mxu0 0
        %289 = vmatpush1.bf16.xpose.msra.mxu0 %v248
        %290 = vmatprep.subr.bf16.mxu0 0
        %291 = vmatpush1.bf16.xpose.msra.mxu0 %v247
        %292 = vmatprep.subr.bf16.mxu0 0
        %293 = vmatpush1.bf16.xpose.msra.mxu0 %v246
        %294 = vmatprep.subr.bf16.mxu0 0
        %295 = vmatpush2.bf16.xpose.msra.mxu0 %v261
        %296 = vmatprep.subr.bf16.mxu0 0
        %297 = vmatpush2.bf16.xpose.msra.mxu0 %v260
        %298 = vmatprep.subr.bf16.mxu0 0
        %299 = vmatpush2.bf16.xpose.msra.mxu0 %v259
        %300 = vmatprep.subr.bf16.mxu0 0
        %301 = vmatpush2.bf16.xpose.msra.mxu0 %v258
        %302 = vmatprep.subr.bf16.mxu0 0
        %303 = vmatpush2.bf16.xpose.msra.mxu0 %v257
        %304 = vmatprep.subr.bf16.mxu0 0
        %305 = vmatpush2.bf16.xpose.msra.mxu0 %v256
        %306 = vmatprep.subr.bf16.mxu0 0
        %307 = vmatpush2.bf16.xpose.msra.mxu0 %v255
        %308 = vmatprep.subr.bf16.mxu0 0
        %309 = vmatpush2.bf16.xpose.msra.mxu0 %v254
        %310 = vmatprep.mubr.bf16.mxu0 0
        %311 = vmatmul.mubr.bf16.gmra.mxu0 %v180
        %v312 = vpop.f32.mrf.mxu0
        %v313 = vadd.f32 0.0, %v312
        %v314 = vpop.f32.mrf.mxu0
        %v315 = vadd.f32 0.0, %v314
        %v316 = vpop.f32.mrf.mxu0
        %v317 = vadd.f32 0.0, %v316
        %v318 = vpop.f32.mrf.mxu0
        %v319 = vadd.f32 0.0, %v318
        %320 = vdwg.mxu0
        %321 = vst [vmem:[%s133] sm:$0xff] %v313
        %322 = vst [vmem:[%s133 + $0x8] sm:$0xff] %v315
        %323 = vst [vmem:[%s133 + $0x10] sm:$0xff] %v317
        %324 = vst [vmem:[%s133 + $0x18] sm:$0xff] %v319
        %s325 = sand.u32 %s68, 1
        %s326 = sand.u32 %s68, 1
        %s327 = smul.addr %s326, 32
        %s328 = scalar_lea.vmem [#allocation2], %s327
        // Predicated region
        $region29: #{moco_forward.6} parent=27 // pred_check
          %p329 = pneg %p78
        $region30: #{moco_forward.6} parent=27 // pred_check_branch
          %331 = sbr.rel (%p329) target = $region32
        $region31: #{moco_forward.6} parent=27 // pred_region
          %s332 = smul.u32 2, %s13
          %s333 = smul.addr %s332, 8
          %s334 = scalar_lea.vmem %s2, %s333
          // Predicated region
          $region33: #{moco_forward.6} parent=31 // pred_check
            _
          $region34: #{moco_forward.6} parent=31 // pred_check_branch
            %336 = sbr.rel (0) target = $region36
          $region35: #{moco_forward.6} parent=31 // pred_region
            // Predicated region
            $region37: #{moco_forward.6} parent=35 // pred_check
              _
            $region38: #{moco_forward.6} parent=35 // pred_check_branch
              %338 = sbr.rel (0) target = $region40
            $region39: #{moco_forward.6} parent=35 // pred_region
              loop: start=0, step=1, limit=1
              $region41: #{moco_forward.6} parent=39 // loop_pre_header
                _
              $region42: #{moco_forward.6} parent=39 // loop_header
                %s340 = sphi 0, %s344
                %p341 = scmp.ge.s32.totalorder %s340, 1
                %s345 = sphi %s328, %s328
                %s346 = sphi %s334, %s334
              $region43: #{moco_forward.6} parent=39 // loop_header_branch
                %343 = sbr.rel (%p341) target = $region47
              $region44: #{moco_forward.6} parent=39 // loop_body
                %v347 = vld [vmem:[%s345] sm:$0xff]
                %348 = vst [vmem:[%s346] sm:$0xff] %v347
                %v349 = vld [vmem:[%s345 + $0x8] sm:$0xff]
                %350 = vst [vmem:[%s346 + $0x8] sm:$0xff] %v349
                %v351 = vld [vmem:[%s345 + $0x10] sm:$0xff]
                %352 = vst [vmem:[%s346 + $0x20] sm:$0xff] %v351
                %v353 = vld [vmem:[%s345 + $0x18] sm:$0xff]
                %354 = vst [vmem:[%s346 + $0x28] sm:$0xff] %v353
              $region45: #{moco_forward.6} parent=39 // loop_footer
                %s344 = sadd.s32 1, %s340
              $region46: #{moco_forward.6} parent=39 // loop_footer_branch
                %339 = sbr.rel target = $region42
              $region47: #{moco_forward.6} parent=39 // loop_exit
                _
            $region40: #{moco_forward.6} parent=35 // pred_fallthru
              _
            // Predicated region
            $region48: #{moco_forward.6} parent=35 // pred_check
              _
            $region49: #{moco_forward.6} parent=35 // pred_check_branch
              %356 = sbr.rel target = $region51
            $region50: #{moco_forward.6} parent=35 // pred_region
              _
            $region51: #{moco_forward.6} parent=35 // pred_fallthru
              _
          $region36: #{moco_forward.6} parent=31 // pred_fallthru
            _
          %357 = vnop
        $region32: #{moco_forward.6} parent=27 // pred_fallthru
          _
      $region28: #{moco_forward.6} parent=5 // pred_fallthru
        _
      %p358 = scmp.le.s32.totalorder 2, %s8
      // Predicated region
      $region52: #{moco_forward.6} parent=5 // pred_check
        %p359 = pneg %p358
      $region53: #{moco_forward.6} parent=5 // pred_check_branch
        %361 = sbr.rel (%p359) target = $region55
      $region54: #{moco_forward.6} parent=5 // pred_region
        %s362 = ssub.s32 %s8, 2
        // Predicated region
        $region56: #{moco_forward.6} parent=54 // pred_check
          %p363 = pneg %p84
        $region57: #{moco_forward.6} parent=54 // pred_check_branch
          %365 = sbr.rel (%p363) target = $region59
        $region58: #{moco_forward.6} parent=54 // pred_region
          %s366 = sand.u32 %s69, 1
          %s367 = sand.u32 %s69, 1
          %s368 = smul.addr %s367, 32
          %s369 = scalar_lea.vmem [#allocation2], %s368
        $region59: #{moco_forward.6} parent=54 // pred_fallthru
          _
      $region55: #{moco_forward.6} parent=5 // pred_fallthru
        _
    $region6: #{moco_forward.6} parent=1 // loop_footer
      %s12 = sadd.s32 1, %s8
    $region7: #{moco_forward.6} parent=1 // loop_footer_branch
      %7 = sbr.rel target = $region3
    $region8: #{moco_forward.6} parent=1 // loop_exit
      _

// kernel: moco_forward.7
$region0: #{moco_forward.7}
  #allocation0 [shape = 'u32[]', space=smem, size = 0x4, offset = 0x4, fixed_abs, tag = 'smem constant byte address 0x4 - core index']
  #allocation1 [shape = 'u32[144,128]{1,0:T(1,128)}', space=vmem, size = 0x12000, scoped, tag = 'internal scratch']
  #allocation2 [shape = 's32[1]{0}', space=sflag, size = 0x4, scoped, tag = 'scoped memory for moco_forward.7']
  #allocation3 [shape = 's32[1]{0:T(128)S(6)}', space=smem, size = 0x200, scoped, tag = 'prefetched SMEM operand 0']
  %s0 = inlined_call_operand.<no memory space> [shape: s32[1], index: 0, kind: input, shape index: {}]
  %s1 = inlined_call_operand.vmem [shape: bf16[16,128], index: 1, kind: input, shape index: {}]
  %s2 = inlined_call_operand.vmem [shape: bf16[512,128], index: 2, kind: input, shape index: {}, may-alias: {2,3}]
  %s3 = inlined_call_operand.vmem [shape: bf16[512,128], index: 3, kind: output, shape index: {}, may-alias: {2,3}]
  %s4 = sld [smem:[#allocation0]]
  $region14: #{moco_forward.7} parent=0
    _
  %s6 = ssub.s32 1, %s4
  %s7 = scalar_select 0, %s6, %s4
  %8 = sst [smem:[#allocation3]] %s0
  // Predicated region
  $region2: #{moco_forward.7} parent=0 // pred_check
    _
  $region3: #{moco_forward.7} parent=0 // pred_check_branch
    %10 = sbr.rel (0) target = $region5
  $region4: #{moco_forward.7} parent=0 // pred_region
    _
  $region5: #{moco_forward.7} parent=0 // pred_fallthru
    _
  %s11 = sld [smem:[#allocation3]]
  %s12 = smul.u32 2, %s11
  %p13 = scmp.lt.s32.totalorder %s12, 63
  %s14 = scalar_select %p13, %s12, 63
  %s15 = smul.addr %s14, 4
  %s16 = scalar_lea.vmem %s3, %s15
  %s17 = sld [smem:[#allocation3]]
  %s18 = smul.u32 2, %s17
  %p19 = scmp.lt.s32.totalorder %s18, 63
  %s20 = scalar_select %p19, %s18, 63
  %s21 = smul.addr %s20, 4
  %s22 = scalar_lea.vmem %s3, %s21
  %s23 = sld [smem:[#allocation3]]
  %s24 = smul.u32 2, %s23
  %v25 = vld [vmem:[%s1] sm:$0xf]
  %v26 = vld [vmem:[%s1 + $0x4] sm:$0xf]
  %27 = vst [vmem:[%s22] sm:$0xf] %v25
  %28 = vst [vmem:[%s22 + $0x4] sm:$0xf] %v26
  %s29 = sld [smem:[#allocation3]]
  %s30 = smul.u32 2, %s29
  %p31 = scmp.lt.s32.totalorder %s30, 63
  %s32 = scalar_select %p31, %s30, 63
  %s33 = smul.addr %s32, 4
  %s34 = scalar_lea.vmem %s3, %s33
  // Predicated region
  $region6: #{moco_forward.7} parent=0 // pred_check
    _
  $region7: #{moco_forward.7} parent=0 // pred_check_branch
    %36 = sbr.rel (0) target = $region9
  $region8: #{moco_forward.7} parent=0 // pred_region
    %s37 = sld [smem:[#allocation3]]
    %s38 = smul.u32 2, %s37
  $region9: #{moco_forward.7} parent=0 // pred_fallthru
    _
  // Predicated region
  $region10: #{moco_forward.7} parent=0 // pred_check
    _
  $region11: #{moco_forward.7} parent=0 // pred_check_branch
    %40 = sbr.rel (0) target = $region13
  $region12: #{moco_forward.7} parent=0 // pred_region
    %s41 = sld [smem:[#allocation3]]
    %s42 = smul.u32 2, %s41
    %p43 = scmp.lt.s32.totalorder %s42, 63
    %s44 = scalar_select %p43, %s42, 63
    %s45 = smul.addr %s44, 4
    %s46 = scalar_lea.vmem %s3, %s45
  $region13: #{moco_forward.7} parent=0 // pred_fallthru
    _

</llo_original>
